<compile_context>
chip_gen: v6e
topology: v6e:2x2x1
jax: 0.10.0
libtpu: 0.0.40
codegen_flags: <defaults>
</compile_context>

<pallas_src>
import numpy as np

import jax
import jax.numpy as jnp
from jax.experimental import pallas as pl
from jax.experimental.pallas import tpu as pltpu  # noqa: F401  (TPU backend)

EPS = 1e-5        # BatchNorm1d default eps
NEG_INF = -1e30   # large negative for masked softmax (avoids inf-inf = nan)


def _round_up(v, m=128):
    return ((v + m - 1) // m) * m


# ----------------------------------------------------------------------------
# Kernel 1: fused GNN trunk
#   (conv1+ReLU+BN1) -> (conv2+ReLU+BN2) -> (conv3+ReLU+BN3) -> concat -> lin1+ReLU
# All intermediates stay in VMEM / vregs; outputs are lane-dense (padded to 128).
# ----------------------------------------------------------------------------
def _fused_tag_kernel(x_ref, adj_ref,
                      w1_ref, b1_ref, g1_ref, be1_ref,
                      w2_ref, b2_ref, g2_ref, be2_ref,
                      w3_ref, b3_ref, g3_ref, be3_ref,
                      wl_ref, bl_ref,
                      xcat_ref, s_ref):
    B, N, _ = x_ref.shape
    adj = adj_ref[...]                                   # (B, N, N)

    def gconv_relu_bn(xk, w_stk, bias, gamma, beta):
        # DenseGraphConv (aggr='add'): lin_rel(adj @ x) + lin_root(x)
        # fused as ONE MXU matmul with stacked weights: [adj@x | x] @ [W_rel; W_root]
        agg = jnp.einsum('bij,bjc->bic', adj, xk,
                         preferred_element_type=jnp.float32)          # (B, N, C_in)
        cin = xk.shape[-1]
        agg2 = agg.reshape(B * N, cin)
        xk2 = xk.reshape(B * N, cin)
        cat2 = jnp.concatenate([agg2, xk2], axis=-1)                   # (B*N, 2*C_in)
        h = jnp.dot(cat2, w_stk, preferred_element_type=jnp.float32) + bias
        h = jnp.maximum(h, 0.0)                                        # ReLU
        # BatchNorm1d, training-mode batch statistics (biased variance), f32.
        mean = jnp.mean(h, axis=0, keepdims=True)
        var = jnp.mean((h - mean) ** 2, axis=0, keepdims=True)
        normed = (h - mean) * jax.lax.rsqrt(var + EPS) * gamma + beta
        return normed.reshape(B, N, h.shape[-1])

    x1 = gconv_relu_bn(x_ref[...], w1_ref[...], b1_ref[...], g1_ref[...], be1_ref[...])
    x2 = gconv_relu_bn(x1,         w2_ref[...], b2_ref[...], g2_ref[...], be2_ref[...])
    x3 = gconv_relu_bn(x2,         w3_ref[...], b3_ref[...], g3_ref[...], be3_ref[...])

    D = x1.shape[-1] + x2.shape[-1] + x3.shape[-1]
    Dpad = xcat_ref.shape[-1]
    pieces = [x1, x2, x3]
    if Dpad > D:
        pieces.append(jnp.zeros((B, N, Dpad - D), jnp.float32))
    xcat = jnp.concatenate(pieces, axis=-1)                            # (B, N, Dpad)
    xcat_ref[...] = xcat

    # lin1 + ReLU on the lane-dense padded slab (pad rows/cols of wl are zero).
    flat = xcat.reshape(B * N, Dpad)
    s = jnp.maximum(
        jnp.dot(flat, wl_ref[...], preferred_element_type=jnp.float32) + bl_ref[...],
        0.0)
    s_ref[...] = s.reshape(B, N, s.shape[-1])


def fused_gnn(params, x, adj, D, O):
    """Run the fused trunk; returns lane-padded (xcat_pad, s_pad)."""
    B, N, _ = x.shape
    Dpad = _round_up(D)
    Opad = _round_up(O)

    def conv_args(conv_name, bn_name):
        w_rel, b_rel, w_root = params[conv_name]
        gamma, beta = params[bn_name]
        C = w_rel.shape[1]
        w_stk = jnp.concatenate([w_rel, w_root], axis=0)   # (2*C_in, C)
        return (w_stk, b_rel.reshape(1, C),
                gamma.reshape(1, C), beta.reshape(1, C))

    a1 = conv_args('conv1', 'bn1')
    a2 = conv_args('conv2', 'bn2')
    a3 = conv_args('conv3', 'bn3')

    wl, bl = params['lin1']
    wl_pad = jnp.zeros((Dpad, Opad), jnp.float32).at[:D, :O].set(wl)
    bl_pad = jnp.zeros((1, Opad), jnp.float32).at[0, :O].set(bl)

    return pl.pallas_call(
        _fused_tag_kernel,
        out_shape=(jax.ShapeDtypeStruct((B, N, Dpad), jnp.float32),
                   jax.ShapeDtypeStruct((B, N, Opad), jnp.float32)),
    )(x, adj, *a1, *a2, *a3, wl_pad, bl_pad)


# ----------------------------------------------------------------------------
# Kernel 2: batched masked attention pooling.
#   rows (P, L, Dpad), att (P, L), mask (P, L) -> out (P, Dpad)
#   out[p] = sum_l softmax_masked(att[p])[l] * rows[p, l]
# Masking only hides padded slots; the zero "pad node" row still receives
# softmax mass, exactly as in the PyTorch reference.
# ----------------------------------------------------------------------------
def _batched_attn_pool_kernel(rows_ref, att_ref, mask_ref, o_ref):
    att = att_ref[...]                                     # (P, L)
    mask = mask_ref[...]                                   # (P, L) in {0, 1}
    am = jnp.where(mask > 0.0, att, NEG_INF)
    m = jnp.max(am, axis=-1, keepdims=True)
    e = jnp.exp(am - m) * mask
    denom = jnp.sum(e, axis=-1, keepdims=True)
    # EUP reciprocal (free bundle slot); +tiny keeps empty pools at exactly 0.
    w = e * pl.reciprocal(denom + 1e-30, approx=True)      # (P, L)
    o_ref[...] = jnp.sum(w[:, :, None] * rows_ref[...], axis=1)


def batched_attn_pool(rows, att, mask):
    P, _, Dpad = rows.shape
    return pl.pallas_call(
        _batched_attn_pool_kernel,
        out_shape=jax.ShapeDtypeStruct((P, Dpad), jnp.float32),
    )(rows, att, mask)


# ----------------------------------------------------------------------------
# Host-side pool construction (pure Python/NumPy index bookkeeping, done once).
# Pool order per team i: [team, sample, remain] -> pools 3i, 3i+1, 3i+2.
# ----------------------------------------------------------------------------
def build_pools(teams, sample_teams, pad_idx, max_len):
    pool_idx, pool_team, pool_pos, pool_mask = [], [], [], []
    for i, team in enumerate(teams):
        team = list(team)
        samp = list(sample_teams[i])
        remain = sorted(set(team) - set(samp) - {pad_idx})
        subsets = (
            (team,   list(range(len(team)))),
            (samp,   [team.index(j) for j in samp]),
            (remain, [team.index(j) for j in remain]),
        )
        for subset, positions in subsets:
            L = len(subset)
            pad = max_len - L
            pool_idx.append(list(subset) + [0] * pad)
            pool_pos.append(list(positions) + [0] * pad)
            pool_mask.append([1.0] * L + [0.0] * pad)
            pool_team.append(i)
    return (np.asarray(pool_idx, np.int32),
            np.asarray(pool_team, np.int32),
            np.asarray(pool_pos, np.int32),
            np.asarray(pool_mask, np.float32))


# ----------------------------------------------------------------------------
# TAG forward
# ----------------------------------------------------------------------------
def tag_forward(params, x, adj, teams, sample_teams, pad_idx):
    B, N, _ = x.shape
    H = params['conv1'][0].shape[1]
    O = params['conv3'][0].shape[1]
    D = 2 * H + O
    max_len = params['attentions'][0].shape[0]

    # Fused GNN trunk (single pallas_call).
    xcat_pad, s_pad = fused_gnn(params, x, adj, D, O)
    xcat = xcat_pad[..., :D]                               # (B, N, D)
    s = s_pad[..., :O]                                     # (B, N, O)

    Dpad = xcat_pad.shape[-1]
    appended_x_pad = jnp.concatenate(
        [xcat_pad[0], jnp.zeros((1, Dpad), jnp.float32)], axis=0)   # (N+1, Dpad)

    # Batched attention pooling: one gather + one kernel for all pools.
    pool_idx, pool_team, pool_pos, pool_mask = build_pools(
        teams, sample_teams, pad_idx, max_len)
    att_stack = jnp.stack(params['attentions'], axis=0)             # (T, max_len)
    pool_att = att_stack[pool_team[:, None], pool_pos]              # (P, max_len)
    rows = appended_x_pad[pool_idx]                                 # (P, max_len, Dpad)

    pooled = batched_attn_pool(rows, pool_att, jnp.asarray(pool_mask))[:, :D]

    T = len(teams)
    team_embedding = [pooled[3 * i] for i in range(T)]
    sample_embedding = [pooled[3 * i + 1] for i in range(T)]
    remain_embedding = [pooled[3 * i + 2] for i in range(T)]

    # attentions[i].detach().numpy() -- single host transfer AFTER device work.
    att_np = jax.device_get(att_stack)
    res = [att_np[i] for i in range(T)]

    return s, xcat, team_embedding, sample_embedding, remain_embedding, res


# ----------------------------------------------------------------------------
# Deterministic parameter construction
# ----------------------------------------------------------------------------
def init_params(key, Cin, H, O, n_teams, max_len):
    ks = jax.random.split(key, 16)

    def lin_w(k, fin, fout):
        bound = (1.0 / fin) ** 0.5
        return jax.random.uniform(k, (fin, fout), jnp.float32, -bound, bound)

    def lin_b(k, fin, fout):
        bound = (1.0 / fin) ** 0.5
        return jax.random.uniform(k, (fout,), jnp.float32, -bound, bound)

    params = {
        # (w_rel, b_rel, w_root) for each DenseGraphConv
        'conv1': (lin_w(ks[0], Cin, H), lin_b(ks[1], Cin, H), lin_w(ks[2], Cin, H)),
        'conv2': (lin_w(ks[3], H, H),   lin_b(ks[4], H, H),   lin_w(ks[5], H, H)),
        'conv3': (lin_w(ks[6], H, O),   lin_b(ks[7], H, O),   lin_w(ks[8], H, O)),
        # (gamma, beta) for each BatchNorm1d
        'bn1': (jnp.ones((H,), jnp.float32), jnp.zeros((H,), jnp.float32)),
        'bn2': (jnp.ones((H,), jnp.float32), jnp.zeros((H,), jnp.float32)),
        'bn3': (jnp.ones((O,), jnp.float32), jnp.zeros((O,), jnp.float32)),
        # lin1: Linear(2H + O, O)
        'lin1': (lin_w(ks[9], 2 * H + O, O), lin_b(ks[10], 2 * H + O, O)),
        # per-team attention vectors (xavier-like deterministic init)
        'attentions': [
            jax.random.uniform(jax.random.fold_in(ks[11], i),
                               (max_len,), jnp.float32, -1.0, 1.0)
            for i in range(n_teams)
        ],
    }
    return params


if __name__ == "__main__":
    key = jax.random.PRNGKey(0)
    B, N, Cin, H, O, max_len = 2, 16, 8, 32, 16, 4
    PAD = N  # analog of node-id 15004: index of the appended all-zero row

    kx, ka, kp = jax.random.split(key, 3)
    x = jax.random.normal(kx, (B, N, Cin), jnp.float32)
    adj = (jax.random.uniform(ka, (B, N, N)) < 0.3).astype(jnp.float32)
    adj = jnp.maximum(adj, jnp.swapaxes(adj, 1, 2))      # symmetric adjacency

    teams = [[0, 3, 7, PAD], [1, 2, 5, 9], [4, 6, 11, PAD]]
    sample_teams = [[3], [2, 9], [4, 11]]

    params = init_params(kp, Cin, H, O, len(teams), max_len)

    s, xcat, team_emb, samp_emb, rem_emb, res = tag_forward(
        params, x, adj, teams, sample_teams, PAD)

    jax.block_until_ready((s, xcat, team_emb, samp_emb, rem_emb))
    D = 2 * H + O
    assert s.shape == (B, N, O)
    assert xcat.shape == (B, N, D)
    assert all(t.shape == (D,) for t in team_emb)
    assert all(t.shape == (D,) for t in samp_emb)
    assert all(t.shape == (D,) for t in rem_emb)
    assert len(res) == len(teams)
    print("KERNEL_OK")
</pallas_src>

<mosaic_0001>
module attributes {stable_mosaic.version = 11 : i64} {
  func.func @_fused_tag_kernel(%arg0: memref<2x16x8xf32, #tpu.memory_space<vmem>>, %arg1: memref<2x16x16xf32, #tpu.memory_space<vmem>>, %arg2: memref<16x32xf32, #tpu.memory_space<vmem>>, %arg3: memref<1x32xf32, #tpu.memory_space<vmem>>, %arg4: memref<1x32xf32, #tpu.memory_space<vmem>>, %arg5: memref<1x32xf32, #tpu.memory_space<vmem>>, %arg6: memref<64x32xf32, #tpu.memory_space<vmem>>, %arg7: memref<1x32xf32, #tpu.memory_space<vmem>>, %arg8: memref<1x32xf32, #tpu.memory_space<vmem>>, %arg9: memref<1x32xf32, #tpu.memory_space<vmem>>, %arg10: memref<64x16xf32, #tpu.memory_space<vmem>>, %arg11: memref<1x16xf32, #tpu.memory_space<vmem>>, %arg12: memref<1x16xf32, #tpu.memory_space<vmem>>, %arg13: memref<1x16xf32, #tpu.memory_space<vmem>>, %arg14: memref<128x128xf32, #tpu.memory_space<vmem>>, %arg15: memref<1x128xf32, #tpu.memory_space<vmem>>, %arg16: memref<2x16x128xf32, #tpu.memory_space<vmem>>, %arg17: memref<2x16x128xf32, #tpu.memory_space<vmem>>) attributes {dimension_semantics = [], scalar_prefetch = 0 : i64, scratch_operands = 0 : i64, tpu.core_type = #tpu.core_type<tc>} {
    %c0 = arith.constant 0 : index
    %c0_0 = arith.constant 0 : index
    %c0_1 = arith.constant 0 : index
    %0 = vector.load %arg1[%c0, %c0_0, %c0_1] : memref<2x16x16xf32, #tpu.memory_space<vmem>>, vector<2x16x16xf32>
    %c0_2 = arith.constant 0 : index
    %c0_3 = arith.constant 0 : index
    %c0_4 = arith.constant 0 : index
    %1 = vector.load %arg0[%c0_2, %c0_3, %c0_4] : memref<2x16x8xf32, #tpu.memory_space<vmem>>, vector<2x16x8xf32>
    %c0_5 = arith.constant 0 : index
    %c0_6 = arith.constant 0 : index
    %2 = vector.load %arg2[%c0_5, %c0_6] : memref<16x32xf32, #tpu.memory_space<vmem>>, vector<16x32xf32>
    %c0_7 = arith.constant 0 : index
    %c0_8 = arith.constant 0 : index
    %3 = vector.load %arg3[%c0_7, %c0_8] : memref<1x32xf32, #tpu.memory_space<vmem>>, vector<1x32xf32>
    %c0_9 = arith.constant 0 : index
    %c0_10 = arith.constant 0 : index
    %4 = vector.load %arg4[%c0_9, %c0_10] : memref<1x32xf32, #tpu.memory_space<vmem>>, vector<1x32xf32>
    %c0_11 = arith.constant 0 : index
    %c0_12 = arith.constant 0 : index
    %5 = vector.load %arg5[%c0_11, %c0_12] : memref<1x32xf32, #tpu.memory_space<vmem>>, vector<1x32xf32>
    "tpu.trace_start"() <{level = 10 : i32, message = "bij,bjc->bic"}> : () -> ()
    %cst = arith.constant dense<0.000000e+00> : vector<2x16x8xf32>
    %6 = tpu.matmul %0, %1, %cst {dimension_numbers = #tpu.dot_dimension_numbers<[2], [1], [1], [2], [0, 0, 0, 1, 1, 2], [0], [0]>} : vector<2x16x16xf32>, vector<2x16x8xf32>, vector<2x16x8xf32> -> vector<2x16x8xf32>
    "tpu.trace_stop"() : () -> ()
    %7 = vector.shape_cast %6 : vector<2x16x8xf32> to vector<32x8xf32>
    %8 = vector.shape_cast %1 : vector<2x16x8xf32> to vector<32x8xf32>
    %9 = tpu.concatenate %7, %8 in 1 : vector<32x8xf32>, vector<32x8xf32> -> vector<32x16xf32>
    %cst_13 = arith.constant dense<0.000000e+00> : vector<32x32xf32>
    %10 = tpu.matmul %9, %2, %cst_13 {dimension_numbers = #tpu.dot_dimension_numbers<[1], [0], [0], [1], [0, 0, 1, 1], [], []>} : vector<32x16xf32>, vector<16x32xf32>, vector<32x32xf32> -> vector<32x32xf32>
    %11 = vector.broadcast %3 : vector<1x32xf32> to vector<32x32xf32>
    %12 = arith.addf %10, %11 : vector<32x32xf32>
    %cst_14 = arith.constant 0.000000e+00 : f32
    %13 = vector.broadcast %cst_14 : f32 to vector<32x32xf32>
    %14 = arith.maximumf %12, %13 : vector<32x32xf32>
    %cst_15 = arith.constant dense<0.000000e+00> : vector<32xf32>
    %15 = vector.multi_reduction <add>, %14, %cst_15 [0] : vector<32x32xf32> to vector<32xf32>
    %16 = vector.shape_cast %15 : vector<32xf32> to vector<1x32xf32>
    %cst_16 = arith.constant 3.200000e+01 : f32
    %17 = vector.broadcast %cst_16 : f32 to vector<1x32xf32>
    %18 = arith.divf %16, %17 : vector<1x32xf32>
    %19 = vector.broadcast %18 : vector<1x32xf32> to vector<32x32xf32>
    %20 = arith.subf %14, %19 : vector<32x32xf32>
    %21 = arith.mulf %20, %20 : vector<32x32xf32>
    %cst_17 = arith.constant dense<0.000000e+00> : vector<32xf32>
    %22 = vector.multi_reduction <add>, %21, %cst_17 [0] : vector<32x32xf32> to vector<32xf32>
    %23 = vector.shape_cast %22 : vector<32xf32> to vector<1x32xf32>
    %cst_18 = arith.constant 3.200000e+01 : f32
    %24 = vector.broadcast %cst_18 : f32 to vector<1x32xf32>
    %25 = arith.divf %23, %24 : vector<1x32xf32>
    %26 = vector.broadcast %18 : vector<1x32xf32> to vector<32x32xf32>
    %27 = arith.subf %14, %26 : vector<32x32xf32>
    %cst_19 = arith.constant 9.99999974E-6 : f32
    %28 = vector.broadcast %cst_19 : f32 to vector<1x32xf32>
    %29 = arith.addf %25, %28 : vector<1x32xf32>
    %30 = math.rsqrt %29 : vector<1x32xf32>
    %31 = vector.broadcast %30 : vector<1x32xf32> to vector<32x32xf32>
    %32 = arith.mulf %27, %31 : vector<32x32xf32>
    %33 = vector.broadcast %4 : vector<1x32xf32> to vector<32x32xf32>
    %34 = arith.mulf %32, %33 : vector<32x32xf32>
    %35 = vector.broadcast %5 : vector<1x32xf32> to vector<32x32xf32>
    %36 = arith.addf %34, %35 : vector<32x32xf32>
    %37 = vector.shape_cast %36 : vector<32x32xf32> to vector<2x16x32xf32>
    %c0_20 = arith.constant 0 : index
    %c0_21 = arith.constant 0 : index
    %38 = vector.load %arg6[%c0_20, %c0_21] : memref<64x32xf32, #tpu.memory_space<vmem>>, vector<64x32xf32>
    %c0_22 = arith.constant 0 : index
    %c0_23 = arith.constant 0 : index
    %39 = vector.load %arg7[%c0_22, %c0_23] : memref<1x32xf32, #tpu.memory_space<vmem>>, vector<1x32xf32>
    %c0_24 = arith.constant 0 : index
    %c0_25 = arith.constant 0 : index
    %40 = vector.load %arg8[%c0_24, %c0_25] : memref<1x32xf32, #tpu.memory_space<vmem>>, vector<1x32xf32>
    %c0_26 = arith.constant 0 : index
    %c0_27 = arith.constant 0 : index
    %41 = vector.load %arg9[%c0_26, %c0_27] : memref<1x32xf32, #tpu.memory_space<vmem>>, vector<1x32xf32>
    "tpu.trace_start"() <{level = 10 : i32, message = "bij,bjc->bic"}> : () -> ()
    %cst_28 = arith.constant dense<0.000000e+00> : vector<2x16x32xf32>
    %42 = tpu.matmul %0, %37, %cst_28 {dimension_numbers = #tpu.dot_dimension_numbers<[2], [1], [1], [2], [0, 0, 0, 1, 1, 2], [0], [0]>} : vector<2x16x16xf32>, vector<2x16x32xf32>, vector<2x16x32xf32> -> vector<2x16x32xf32>
    "tpu.trace_stop"() : () -> ()
    %43 = vector.shape_cast %42 : vector<2x16x32xf32> to vector<32x32xf32>
    %44 = vector.shape_cast %37 : vector<2x16x32xf32> to vector<32x32xf32>
    %45 = tpu.concatenate %43, %44 in 1 : vector<32x32xf32>, vector<32x32xf32> -> vector<32x64xf32>
    %cst_29 = arith.constant dense<0.000000e+00> : vector<32x32xf32>
    %46 = tpu.matmul %45, %38, %cst_29 {dimension_numbers = #tpu.dot_dimension_numbers<[1], [0], [0], [1], [0, 0, 1, 1], [], []>} : vector<32x64xf32>, vector<64x32xf32>, vector<32x32xf32> -> vector<32x32xf32>
    %47 = vector.broadcast %39 : vector<1x32xf32> to vector<32x32xf32>
    %48 = arith.addf %46, %47 : vector<32x32xf32>
    %cst_30 = arith.constant 0.000000e+00 : f32
    %49 = vector.broadcast %cst_30 : f32 to vector<32x32xf32>
    %50 = arith.maximumf %48, %49 : vector<32x32xf32>
    %cst_31 = arith.constant dense<0.000000e+00> : vector<32xf32>
    %51 = vector.multi_reduction <add>, %50, %cst_31 [0] : vector<32x32xf32> to vector<32xf32>
    %52 = vector.shape_cast %51 : vector<32xf32> to vector<1x32xf32>
    %cst_32 = arith.constant 3.200000e+01 : f32
    %53 = vector.broadcast %cst_32 : f32 to vector<1x32xf32>
    %54 = arith.divf %52, %53 : vector<1x32xf32>
    %55 = vector.broadcast %54 : vector<1x32xf32> to vector<32x32xf32>
    %56 = arith.subf %50, %55 : vector<32x32xf32>
    %57 = arith.mulf %56, %56 : vector<32x32xf32>
    %cst_33 = arith.constant dense<0.000000e+00> : vector<32xf32>
    %58 = vector.multi_reduction <add>, %57, %cst_33 [0] : vector<32x32xf32> to vector<32xf32>
    %59 = vector.shape_cast %58 : vector<32xf32> to vector<1x32xf32>
    %cst_34 = arith.constant 3.200000e+01 : f32
    %60 = vector.broadcast %cst_34 : f32 to vector<1x32xf32>
    %61 = arith.divf %59, %60 : vector<1x32xf32>
    %62 = vector.broadcast %54 : vector<1x32xf32> to vector<32x32xf32>
    %63 = arith.subf %50, %62 : vector<32x32xf32>
    %cst_35 = arith.constant 9.99999974E-6 : f32
    %64 = vector.broadcast %cst_35 : f32 to vector<1x32xf32>
    %65 = arith.addf %61, %64 : vector<1x32xf32>
    %66 = math.rsqrt %65 : vector<1x32xf32>
    %67 = vector.broadcast %66 : vector<1x32xf32> to vector<32x32xf32>
    %68 = arith.mulf %63, %67 : vector<32x32xf32>
    %69 = vector.broadcast %40 : vector<1x32xf32> to vector<32x32xf32>
    %70 = arith.mulf %68, %69 : vector<32x32xf32>
    %71 = vector.broadcast %41 : vector<1x32xf32> to vector<32x32xf32>
    %72 = arith.addf %70, %71 : vector<32x32xf32>
    %73 = vector.shape_cast %72 : vector<32x32xf32> to vector<2x16x32xf32>
    %c0_36 = arith.constant 0 : index
    %c0_37 = arith.constant 0 : index
    %74 = vector.load %arg10[%c0_36, %c0_37] : memref<64x16xf32, #tpu.memory_space<vmem>>, vector<64x16xf32>
    %c0_38 = arith.constant 0 : index
    %c0_39 = arith.constant 0 : index
    %75 = vector.load %arg11[%c0_38, %c0_39] : memref<1x16xf32, #tpu.memory_space<vmem>>, vector<1x16xf32>
    %c0_40 = arith.constant 0 : index
    %c0_41 = arith.constant 0 : index
    %76 = vector.load %arg12[%c0_40, %c0_41] : memref<1x16xf32, #tpu.memory_space<vmem>>, vector<1x16xf32>
    %c0_42 = arith.constant 0 : index
    %c0_43 = arith.constant 0 : index
    %77 = vector.load %arg13[%c0_42, %c0_43] : memref<1x16xf32, #tpu.memory_space<vmem>>, vector<1x16xf32>
    "tpu.trace_start"() <{level = 10 : i32, message = "bij,bjc->bic"}> : () -> ()
    %cst_44 = arith.constant dense<0.000000e+00> : vector<2x16x32xf32>
    %78 = tpu.matmul %0, %73, %cst_44 {dimension_numbers = #tpu.dot_dimension_numbers<[2], [1], [1], [2], [0, 0, 0, 1, 1, 2], [0], [0]>} : vector<2x16x16xf32>, vector<2x16x32xf32>, vector<2x16x32xf32> -> vector<2x16x32xf32>
    "tpu.trace_stop"() : () -> ()
    %79 = vector.shape_cast %78 : vector<2x16x32xf32> to vector<32x32xf32>
    %80 = vector.shape_cast %73 : vector<2x16x32xf32> to vector<32x32xf32>
    %81 = tpu.concatenate %79, %80 in 1 : vector<32x32xf32>, vector<32x32xf32> -> vector<32x64xf32>
    %cst_45 = arith.constant dense<0.000000e+00> : vector<32x16xf32>
    %82 = tpu.matmul %81, %74, %cst_45 {dimension_numbers = #tpu.dot_dimension_numbers<[1], [0], [0], [1], [0, 0, 1, 1], [], []>} : vector<32x64xf32>, vector<64x16xf32>, vector<32x16xf32> -> vector<32x16xf32>
    %83 = vector.broadcast %75 : vector<1x16xf32> to vector<32x16xf32>
    %84 = arith.addf %82, %83 : vector<32x16xf32>
    %cst_46 = arith.constant 0.000000e+00 : f32
    %85 = vector.broadcast %cst_46 : f32 to vector<32x16xf32>
    %86 = arith.maximumf %84, %85 : vector<32x16xf32>
    %cst_47 = arith.constant dense<0.000000e+00> : vector<16xf32>
    %87 = vector.multi_reduction <add>, %86, %cst_47 [0] : vector<32x16xf32> to vector<16xf32>
    %88 = vector.shape_cast %87 : vector<16xf32> to vector<1x16xf32>
    %cst_48 = arith.constant 3.200000e+01 : f32
    %89 = vector.broadcast %cst_48 : f32 to vector<1x16xf32>
    %90 = arith.divf %88, %89 : vector<1x16xf32>
    %91 = vector.broadcast %90 : vector<1x16xf32> to vector<32x16xf32>
    %92 = arith.subf %86, %91 : vector<32x16xf32>
    %93 = arith.mulf %92, %92 : vector<32x16xf32>
    %cst_49 = arith.constant dense<0.000000e+00> : vector<16xf32>
    %94 = vector.multi_reduction <add>, %93, %cst_49 [0] : vector<32x16xf32> to vector<16xf32>
    %95 = vector.shape_cast %94 : vector<16xf32> to vector<1x16xf32>
    %cst_50 = arith.constant 3.200000e+01 : f32
    %96 = vector.broadcast %cst_50 : f32 to vector<1x16xf32>
    %97 = arith.divf %95, %96 : vector<1x16xf32>
    %98 = vector.broadcast %90 : vector<1x16xf32> to vector<32x16xf32>
    %99 = arith.subf %86, %98 : vector<32x16xf32>
    %cst_51 = arith.constant 9.99999974E-6 : f32
    %100 = vector.broadcast %cst_51 : f32 to vector<1x16xf32>
    %101 = arith.addf %97, %100 : vector<1x16xf32>
    %102 = math.rsqrt %101 : vector<1x16xf32>
    %103 = vector.broadcast %102 : vector<1x16xf32> to vector<32x16xf32>
    %104 = arith.mulf %99, %103 : vector<32x16xf32>
    %105 = vector.broadcast %76 : vector<1x16xf32> to vector<32x16xf32>
    %106 = arith.mulf %104, %105 : vector<32x16xf32>
    %107 = vector.broadcast %77 : vector<1x16xf32> to vector<32x16xf32>
    %108 = arith.addf %106, %107 : vector<32x16xf32>
    %109 = vector.shape_cast %108 : vector<32x16xf32> to vector<2x16x16xf32>
    %cst_52 = arith.constant 0.000000e+00 : f32
    %110 = vector.broadcast %cst_52 : f32 to vector<2x16x48xf32>
    %111 = tpu.concatenate %37, %73, %109, %110 in 2 : vector<2x16x32xf32>, vector<2x16x32xf32>, vector<2x16x16xf32>, vector<2x16x48xf32> -> vector<2x16x128xf32>
    %c0_53 = arith.constant 0 : index
    %c0_54 = arith.constant 0 : index
    %c0_55 = arith.constant 0 : index
    %112 = vector.load %arg16[%c0_53, %c0_54, %c0_55] : memref<2x16x128xf32, #tpu.memory_space<vmem>>, vector<2x16x128xf32>
    tpu.vector_store %arg16[%c0_53, %c0_54, %c0_55], %111 {strides = array<i32>} : memref<2x16x128xf32, #tpu.memory_space<vmem>>, vector<2x16x128xf32>,
    %113 = vector.shape_cast %111 : vector<2x16x128xf32> to vector<32x128xf32>
    %c0_56 = arith.constant 0 : index
    %c0_57 = arith.constant 0 : index
    %114 = vector.load %arg14[%c0_56, %c0_57] : memref<128x128xf32, #tpu.memory_space<vmem>>, vector<128x128xf32>
    %cst_58 = arith.constant dense<0.000000e+00> : vector<32x128xf32>
    %115 = tpu.matmul %113, %114, %cst_58 {dimension_numbers = #tpu.dot_dimension_numbers<[1], [0], [0], [1], [0, 0, 1, 1], [], []>} : vector<32x128xf32>, vector<128x128xf32>, vector<32x128xf32> -> vector<32x128xf32>
    %c0_59 = arith.constant 0 : index
    %c0_60 = arith.constant 0 : index
    %116 = vector.load %arg15[%c0_59, %c0_60] : memref<1x128xf32, #tpu.memory_space<vmem>>, vector<1x128xf32>
    %117 = vector.broadcast %116 : vector<1x128xf32> to vector<32x128xf32>
    %118 = arith.addf %115, %117 : vector<32x128xf32>
    %cst_61 = arith.constant 0.000000e+00 : f32
    %119 = vector.broadcast %cst_61 : f32 to vector<32x128xf32>
    %120 = arith.maximumf %118, %119 : vector<32x128xf32>
    %121 = vector.shape_cast %120 : vector<32x128xf32> to vector<2x16x128xf32>
    %c0_62 = arith.constant 0 : index
    %c0_63 = arith.constant 0 : index
    %c0_64 = arith.constant 0 : index
    %122 = vector.load %arg17[%c0_62, %c0_63, %c0_64] : memref<2x16x128xf32, #tpu.memory_space<vmem>>, vector<2x16x128xf32>
    tpu.vector_store %arg17[%c0_62, %c0_63, %c0_64], %121 {strides = array<i32>} : memref<2x16x128xf32, #tpu.memory_space<vmem>>, vector<2x16x128xf32>,
    return
  }
}

</mosaic_0001>

<llo_original>
// kernel: tpu_custom_call.1
$region0: #{tpu_custom_call.1}
  #allocation0 [shape = 'u32[]', space=smem, size = 0x4, offset = 0x4, fixed_abs, tag = 'smem constant byte address 0x4 - core index']
  #allocation1 [shape = 'u32[144,128]{1,0:T(1,128)}', space=vmem, size = 0x12000, scoped, tag = 'internal scratch']
  %s0 = inlined_call_operand.vmem [shape: f32[2,16,8], index: 0, kind: input, shape index: {}]
  %s1 = inlined_call_operand.vmem [shape: f32[2,16,16], index: 1, kind: input, shape index: {}]
  %s2 = inlined_call_operand.vmem [shape: f32[16,32], index: 2, kind: input, shape index: {}]
  %s3 = inlined_call_operand.vmem [shape: f32[1,32], index: 3, kind: input, shape index: {}]
  %s4 = inlined_call_operand.vmem [shape: f32[1,32], index: 4, kind: input, shape index: {}]
  %s5 = inlined_call_operand.vmem [shape: f32[1,32], index: 5, kind: input, shape index: {}]
  %s6 = inlined_call_operand.vmem [shape: f32[64,32], index: 6, kind: input, shape index: {}]
  %s7 = inlined_call_operand.vmem [shape: f32[1,32], index: 7, kind: input, shape index: {}]
  %s8 = inlined_call_operand.vmem [shape: f32[1,32], index: 8, kind: input, shape index: {}]
  %s9 = inlined_call_operand.vmem [shape: f32[1,32], index: 9, kind: input, shape index: {}]
  %s10 = inlined_call_operand.vmem [shape: f32[64,16], index: 10, kind: input, shape index: {}]
  %s11 = inlined_call_operand.vmem [shape: f32[1,16], index: 11, kind: input, shape index: {}]
  %s12 = inlined_call_operand.vmem [shape: f32[1,16], index: 12, kind: input, shape index: {}]
  %s13 = inlined_call_operand.vmem [shape: f32[1,16], index: 13, kind: input, shape index: {}]
  %s14 = inlined_call_operand.vmem [shape: f32[128,128], index: 14, kind: input, shape index: {}]
  %s15 = inlined_call_operand.vmem [shape: f32[1,128], index: 15, kind: input, shape index: {}]
  %s16 = inlined_call_operand.hbm [shape: f32[2,16,128], index: 16, kind: output, shape index: {0}]
  %s17 = inlined_call_operand.hbm [shape: f32[2,16,128], index: 17, kind: output, shape index: {1}]
  %18 = xla_tuple %s16, %s17
  %s19 = sld [smem:[#allocation0]]
  $region82: #{tpu_custom_call.1} parent=0
    _
  %s21 = ssub.s32 1, %s19
  %s22 = scalar_select 0, %s21, %s19
  $region1: #{tpu_custom_call.1} parent=0
    #allocation2 [shape = 'u8[16384]{0}', space=vmem, size = 0x4000, scoped, tag = 'output window, operand 0, single buffered']
    #allocation3 [shape = 's32[1]{0}', space=sflag, size = 0x4, scoped, tag = 'scoped memory for tpu_custom_call.1']
    #allocation4 [shape = 'u8[16384]{0}', space=vmem, size = 0x4000, scoped, tag = 'output window, operand 1, single buffered']
    #allocation5 [shape = 's32[1]{0}', space=sflag, size = 0x4, scoped, tag = 'scoped memory for tpu_custom_call.1']
    %23 = vsyncpa [#allocation3], 0
    %24 = vsyncpa [#allocation5], 0
    // Predicated region
    $region2: #{tpu_custom_call.1} parent=1 // pred_check
      _
    $region3: #{tpu_custom_call.1} parent=1 // pred_check_branch
      %26 = sbr.rel (0) target = $region5
    $region4: #{tpu_custom_call.1} parent=1 // pred_region
      _
    $region5: #{tpu_custom_call.1} parent=1 // pred_fallthru
      _
    // Predicated region
    $region6: #{tpu_custom_call.1} parent=1 // pred_check
      _
    $region7: #{tpu_custom_call.1} parent=1 // pred_check_branch
      %28 = sbr.rel (0) target = $region9
    $region8: #{tpu_custom_call.1} parent=1 // pred_region
      _
    $region9: #{tpu_custom_call.1} parent=1 // pred_fallthru
      _
    // Predicated region
    $region10: #{tpu_custom_call.1} parent=1 // pred_check
      _
    $region11: #{tpu_custom_call.1} parent=1 // pred_check_branch
      %30 = sbr.rel (0) target = $region13
    $region12: #{tpu_custom_call.1} parent=1 // pred_region
      _
    $region13: #{tpu_custom_call.1} parent=1 // pred_fallthru
      _
    // Predicated region
    $region14: #{tpu_custom_call.1} parent=1 // pred_check
      _
    $region15: #{tpu_custom_call.1} parent=1 // pred_check_branch
      %32 = sbr.rel (0) target = $region17
    $region16: #{tpu_custom_call.1} parent=1 // pred_region
      _
    $region17: #{tpu_custom_call.1} parent=1 // pred_fallthru
      _
    // Predicated region
    $region18: #{tpu_custom_call.1} parent=1 // pred_check
      _
    $region19: #{tpu_custom_call.1} parent=1 // pred_check_branch
      %34 = sbr.rel (0) target = $region21
    $region20: #{tpu_custom_call.1} parent=1 // pred_region
      _
    $region21: #{tpu_custom_call.1} parent=1 // pred_fallthru
      _
    // Predicated region
    $region22: #{tpu_custom_call.1} parent=1 // pred_check
      _
    $region23: #{tpu_custom_call.1} parent=1 // pred_check_branch
      %36 = sbr.rel (0) target = $region25
    $region24: #{tpu_custom_call.1} parent=1 // pred_region
      _
    $region25: #{tpu_custom_call.1} parent=1 // pred_fallthru
      _
    // Predicated region
    $region26: #{tpu_custom_call.1} parent=1 // pred_check
      _
    $region27: #{tpu_custom_call.1} parent=1 // pred_check_branch
      %38 = sbr.rel (0) target = $region29
    $region28: #{tpu_custom_call.1} parent=1 // pred_region
      _
    $region29: #{tpu_custom_call.1} parent=1 // pred_fallthru
      _
    // Predicated region
    $region30: #{tpu_custom_call.1} parent=1 // pred_check
      _
    $region31: #{tpu_custom_call.1} parent=1 // pred_check_branch
      %40 = sbr.rel (0) target = $region33
    $region32: #{tpu_custom_call.1} parent=1 // pred_region
      _
    $region33: #{tpu_custom_call.1} parent=1 // pred_fallthru
      _
    // Predicated region
    $region34: #{tpu_custom_call.1} parent=1 // pred_check
      _
    $region35: #{tpu_custom_call.1} parent=1 // pred_check_branch
      %42 = sbr.rel (0) target = $region37
    $region36: #{tpu_custom_call.1} parent=1 // pred_region
      _
    $region37: #{tpu_custom_call.1} parent=1 // pred_fallthru
      _
    // Predicated region
    $region38: #{tpu_custom_call.1} parent=1 // pred_check
      _
    $region39: #{tpu_custom_call.1} parent=1 // pred_check_branch
      %44 = sbr.rel (0) target = $region41
    $region40: #{tpu_custom_call.1} parent=1 // pred_region
      _
    $region41: #{tpu_custom_call.1} parent=1 // pred_fallthru
      _
    // Predicated region
    $region42: #{tpu_custom_call.1} parent=1 // pred_check
      _
    $region43: #{tpu_custom_call.1} parent=1 // pred_check_branch
      %46 = sbr.rel (0) target = $region45
    $region44: #{tpu_custom_call.1} parent=1 // pred_region
      _
    $region45: #{tpu_custom_call.1} parent=1 // pred_fallthru
      _
    // Predicated region
    $region46: #{tpu_custom_call.1} parent=1 // pred_check
      _
    $region47: #{tpu_custom_call.1} parent=1 // pred_check_branch
      %48 = sbr.rel (0) target = $region49
    $region48: #{tpu_custom_call.1} parent=1 // pred_region
      _
    $region49: #{tpu_custom_call.1} parent=1 // pred_fallthru
      _
    // Predicated region
    $region50: #{tpu_custom_call.1} parent=1 // pred_check
      _
    $region51: #{tpu_custom_call.1} parent=1 // pred_check_branch
      %50 = sbr.rel (0) target = $region53
    $region52: #{tpu_custom_call.1} parent=1 // pred_region
      _
    $region53: #{tpu_custom_call.1} parent=1 // pred_fallthru
      _
    // Predicated region
    $region54: #{tpu_custom_call.1} parent=1 // pred_check
      _
    $region55: #{tpu_custom_call.1} parent=1 // pred_check_branch
      %52 = sbr.rel (0) target = $region57
    $region56: #{tpu_custom_call.1} parent=1 // pred_region
      _
    $region57: #{tpu_custom_call.1} parent=1 // pred_fallthru
      _
    // Predicated region
    $region58: #{tpu_custom_call.1} parent=1 // pred_check
      _
    $region59: #{tpu_custom_call.1} parent=1 // pred_check_branch
      %54 = sbr.rel (0) target = $region61
    $region60: #{tpu_custom_call.1} parent=1 // pred_region
      _
    $region61: #{tpu_custom_call.1} parent=1 // pred_fallthru
      _
    // Predicated region
    $region62: #{tpu_custom_call.1} parent=1 // pred_check
      _
    $region63: #{tpu_custom_call.1} parent=1 // pred_check_branch
      %56 = sbr.rel (0) target = $region65
    $region64: #{tpu_custom_call.1} parent=1 // pred_region
      _
    $region65: #{tpu_custom_call.1} parent=1 // pred_fallthru
      _
    %v57 = vld [vmem:[%s1] sm:$0xff]
    %v58 = vld [vmem:[%s1 + $0x8] sm:$0xff]
    %v59 = vld [vmem:[%s1 + $0x10] sm:$0xff]
    %v60 = vld [vmem:[%s1 + $0x18] sm:$0xff]
    %v61 = vld [vmem:[%s0] sm:$0xff]
    %v62 = vld [vmem:[%s0 + $0x8] sm:$0xff]
    %v63 = vld [vmem:[%s0 + $0x10] sm:$0xff]
    %v64 = vld [vmem:[%s0 + $0x18] sm:$0xff]
    %v65 = vld [vmem:[%s2] sm:$0xff]
    %v66 = vld [vmem:[%s2 + $0x8] sm:$0xff]
    %v67 = vld [vmem:[%s3] sm:$0x1]
    %v68 = vld [vmem:[%s4] sm:$0x1]
    %v69 = vld [vmem:[%s5] sm:$0x1]
    %vm70 = vcmask 130048
    %v72 = vsel %vm70, %v57, 0
    %v75 = vsel %vm70, %v58, 0
    %77 = vmatprep.subr.mxu0 0.0
    %78 = vmatpush1.msra.mxu0 0.0
    %79 = vmatprep.subr.mxu0 0.0
    %80 = vmatpush1.msra.mxu0 0.0
    %81 = vmatprep.subr.mxu0 0.0
    %82 = vmatpush1.msra.mxu0 0.0
    %83 = vmatprep.subr.mxu0 0.0
    %84 = vmatpush1.msra.mxu0 0.0
    %85 = vmatprep.subr.mxu0 0.0
    %86 = vmatpush1.msra.mxu0 0.0
    %87 = vmatprep.subr.mxu0 0.0
    %88 = vmatpush1.msra.mxu0 0.0
    %89 = vmatprep.subr.mxu0 0.0
    %90 = vmatpush1.msra.mxu0 0.0
    %91 = vmatprep.subr.mxu0 0.0
    %92 = vmatpush1.msra.mxu0 0.0
    %93 = vmatprep.subr.mxu0 0.0
    %94 = vmatpush1.msra.mxu0 0.0
    %95 = vmatprep.subr.mxu0 0.0
    %96 = vmatpush1.msra.mxu0 0.0
    %97 = vmatprep.subr.mxu0 0.0
    %98 = vmatpush1.msra.mxu0 0.0
    %99 = vmatprep.subr.mxu0 0.0
    %100 = vmatpush1.msra.mxu0 0.0
    %101 = vmatprep.subr.mxu0 0.0
    %102 = vmatpush1.msra.mxu0 0.0
    %103 = vmatprep.subr.mxu0 0.0
    %104 = vmatpush1.msra.mxu0 0.0
    %105 = vmatprep.subr.mxu0 0.0
    %106 = vmatpush1.msra.mxu0 %v62
    %107 = vmatprep.subr.mxu0 0.0
    %108 = vmatpush1.msra.mxu0 %v61
    %109 = vmatprep.subr.mxu0 0.0
    %110 = vmatpush2.msra.mxu0 0.0
    %111 = vmatprep.subr.mxu0 0.0
    %112 = vmatpush2.msra.mxu0 0.0
    %113 = vmatprep.subr.mxu0 0.0
    %114 = vmatpush2.msra.mxu0 0.0
    %115 = vmatprep.subr.mxu0 0.0
    %116 = vmatpush2.msra.mxu0 0.0
    %117 = vmatprep.subr.mxu0 0.0
    %118 = vmatpush2.msra.mxu0 0.0
    %119 = vmatprep.subr.mxu0 0.0
    %120 = vmatpush2.msra.mxu0 0.0
    %121 = vmatprep.subr.mxu0 0.0
    %122 = vmatpush2.msra.mxu0 0.0
    %123 = vmatprep.subr.mxu0 0.0
    %124 = vmatpush2.msra.mxu0 0.0
    %125 = vmatprep.subr.mxu0 0.0
    %126 = vmatpush2.msra.mxu0 0.0
    %127 = vmatprep.subr.mxu0 0.0
    %128 = vmatpush2.msra.mxu0 0.0
    %129 = vmatprep.subr.mxu0 0.0
    %130 = vmatpush2.msra.mxu0 0.0
    %131 = vmatprep.subr.mxu0 0.0
    %132 = vmatpush2.msra.mxu0 0.0
    %133 = vmatprep.subr.mxu0 0.0
    %134 = vmatpush2.msra.mxu0 0.0
    %135 = vmatprep.subr.mxu0 0.0
    %136 = vmatpush2.msra.mxu0 0.0
    %137 = vmatprep.subr.mxu0 0.0
    %138 = vmatpush2.msra.mxu0 0.0
    %139 = vmatprep.subr.mxu0 0.0
    %140 = vmatpush2.msra.mxu0 0.0
    %141 = vmatprep.mubr.f32.mxu0 0.0
    %142 = vmatmul.mubr.f32.gmra.mxu0 %v72
    %v143 = vpop.f32.mrf.mxu0
    %v144 = vadd.f32 0.0, %v143
    %v145 = vpop.f32.mrf.mxu0
    %146 = vmatprep.mubr.f32.mxu0 0.0
    %147 = vmatmul.mubr.f32.gmra.mxu0 %v75
    %v148 = vpop.f32.mrf.mxu0
    %v149 = vadd.f32 0.0, %v148
    %v150 = vpop.f32.mrf.mxu0
    %151 = vdwg.mxu0
    %v153 = vsel %vm70, %v59, 0
    %v156 = vsel %vm70, %v60, 0
    %158 = vmatprep.subr.mxu0 0.0
    %159 = vmatpush1.msra.mxu0 0.0
    %160 = vmatprep.subr.mxu0 0.0
    %161 = vmatpush1.msra.mxu0 0.0
    %162 = vmatprep.subr.mxu0 0.0
    %163 = vmatpush1.msra.mxu0 0.0
    %164 = vmatprep.subr.mxu0 0.0
    %165 = vmatpush1.msra.mxu0 0.0
    %166 = vmatprep.subr.mxu0 0.0
    %167 = vmatpush1.msra.mxu0 0.0
    %168 = vmatprep.subr.mxu0 0.0
    %169 = vmatpush1.msra.mxu0 0.0
    %170 = vmatprep.subr.mxu0 0.0
    %171 = vmatpush1.msra.mxu0 0.0
    %172 = vmatprep.subr.mxu0 0.0
    %173 = vmatpush1.msra.mxu0 0.0
    %174 = vmatprep.subr.mxu0 0.0
    %175 = vmatpush1.msra.mxu0 0.0
    %176 = vmatprep.subr.mxu0 0.0
    %177 = vmatpush1.msra.mxu0 0.0
    %178 = vmatprep.subr.mxu0 0.0
    %179 = vmatpush1.msra.mxu0 0.0
    %180 = vmatprep.subr.mxu0 0.0
    %181 = vmatpush1.msra.mxu0 0.0
    %182 = vmatprep.subr.mxu0 0.0
    %183 = vmatpush1.msra.mxu0 0.0
    %184 = vmatprep.subr.mxu0 0.0
    %185 = vmatpush1.msra.mxu0 0.0
    %186 = vmatprep.subr.mxu0 0.0
    %187 = vmatpush1.msra.mxu0 %v64
    %188 = vmatprep.subr.mxu0 0.0
    %189 = vmatpush1.msra.mxu0 %v63
    %190 = vmatprep.subr.mxu0 0.0
    %191 = vmatpush2.msra.mxu0 0.0
    %192 = vmatprep.subr.mxu0 0.0
    %193 = vmatpush2.msra.mxu0 0.0
    %194 = vmatprep.subr.mxu0 0.0
    %195 = vmatpush2.msra.mxu0 0.0
    %196 = vmatprep.subr.mxu0 0.0
    %197 = vmatpush2.msra.mxu0 0.0
    %198 = vmatprep.subr.mxu0 0.0
    %199 = vmatpush2.msra.mxu0 0.0
    %200 = vmatprep.subr.mxu0 0.0
    %201 = vmatpush2.msra.mxu0 0.0
    %202 = vmatprep.subr.mxu0 0.0
    %203 = vmatpush2.msra.mxu0 0.0
    %204 = vmatprep.subr.mxu0 0.0
    %205 = vmatpush2.msra.mxu0 0.0
    %206 = vmatprep.subr.mxu0 0.0
    %207 = vmatpush2.msra.mxu0 0.0
    %208 = vmatprep.subr.mxu0 0.0
    %209 = vmatpush2.msra.mxu0 0.0
    %210 = vmatprep.subr.mxu0 0.0
    %211 = vmatpush2.msra.mxu0 0.0
    %212 = vmatprep.subr.mxu0 0.0
    %213 = vmatpush2.msra.mxu0 0.0
    %214 = vmatprep.subr.mxu0 0.0
    %215 = vmatpush2.msra.mxu0 0.0
    %216 = vmatprep.subr.mxu0 0.0
    %217 = vmatpush2.msra.mxu0 0.0
    %218 = vmatprep.subr.mxu0 0.0
    %219 = vmatpush2.msra.mxu0 0.0
    %220 = vmatprep.subr.mxu0 0.0
    %221 = vmatpush2.msra.mxu0 0.0
    %222 = vmatprep.mubr.f32.mxu0 0.0
    %223 = vmatmul.mubr.f32.gmra.mxu0 %v153
    %v224 = vpop.f32.mrf.mxu0
    %v225 = vadd.f32 0.0, %v224
    %v226 = vpop.f32.mrf.mxu0
    %227 = vmatprep.mubr.f32.mxu0 0.0
    %228 = vmatmul.mubr.f32.gmra.mxu0 %v156
    %v229 = vpop.f32.mrf.mxu0
    %v230 = vadd.f32 0.0, %v229
    %v231 = vpop.f32.mrf.mxu0
    %232 = vdwg.mxu0
    %237 = vrot.lane.b32.xlu0 %v61, 8
    %v238 = vpop.permute.xlu0 %237
    %239 = vrot.lane.b32.xlu0 %v62, 8
    %v240 = vpop.permute.xlu0 %239
    %241 = vrot.lane.b32.xlu0 %v63, 8
    %v242 = vpop.permute.xlu0 %241
    %243 = vrot.lane.b32.xlu0 %v64, 8
    %v244 = vpop.permute.xlu0 %243
    %vm249 = vcmask 64512
    %v250 = vsel %vm249, %v144, %v238
    %v251 = vsel %vm249, %v149, %v240
    %v252 = vsel %vm249, %v225, %v242
    %v253 = vsel %vm249, %v230, %v244
    %v255 = vlaneseq
    %v256 = vshrl.u32 %v255, 7
    %v257 = vsub.s32 0, %v256
    %v258 = vrot.slane %v67, %v257
    %v261 = vsel %vm70, %v250, 0
    %v264 = vsel %vm70, %v251, 0
    %v267 = vsel %vm70, %v252, 0
    %v270 = vsel %vm70, %v253, 0
    %272 = vmatprep.subr.mxu0 0.0
    %273 = vmatpush1.msra.mxu0 0.0
    %274 = vmatprep.subr.mxu0 0.0
    %275 = vmatpush1.msra.mxu0 0.0
    %276 = vmatprep.subr.mxu0 0.0
    %277 = vmatpush1.msra.mxu0 0.0
    %278 = vmatprep.subr.mxu0 0.0
    %279 = vmatpush1.msra.mxu0 0.0
    %280 = vmatprep.subr.mxu0 0.0
    %281 = vmatpush1.msra.mxu0 0.0
    %282 = vmatprep.subr.mxu0 0.0
    %283 = vmatpush1.msra.mxu0 0.0
    %284 = vmatprep.subr.mxu0 0.0
    %285 = vmatpush1.msra.mxu0 0.0
    %286 = vmatprep.subr.mxu0 0.0
    %287 = vmatpush1.msra.mxu0 0.0
    %288 = vmatprep.subr.mxu0 0.0
    %289 = vmatpush1.msra.mxu0 0.0
    %290 = vmatprep.subr.mxu0 0.0
    %291 = vmatpush1.msra.mxu0 0.0
    %292 = vmatprep.subr.mxu0 0.0
    %293 = vmatpush1.msra.mxu0 0.0
    %294 = vmatprep.subr.mxu0 0.0
    %295 = vmatpush1.msra.mxu0 0.0
    %296 = vmatprep.subr.mxu0 0.0
    %297 = vmatpush1.msra.mxu0 0.0
    %298 = vmatprep.subr.mxu0 0.0
    %299 = vmatpush1.msra.mxu0 0.0
    %300 = vmatprep.subr.mxu0 0.0
    %301 = vmatpush1.msra.mxu0 %v66
    %302 = vmatprep.subr.mxu0 0.0
    %303 = vmatpush1.msra.mxu0 %v65
    %304 = vmatprep.subr.mxu0 0.0
    %305 = vmatpush2.msra.mxu0 0.0
    %306 = vmatprep.subr.mxu0 0.0
    %307 = vmatpush2.msra.mxu0 0.0
    %308 = vmatprep.subr.mxu0 0.0
    %309 = vmatpush2.msra.mxu0 0.0
    %310 = vmatprep.subr.mxu0 0.0
    %311 = vmatpush2.msra.mxu0 0.0
    %312 = vmatprep.subr.mxu0 0.0
    %313 = vmatpush2.msra.mxu0 0.0
    %314 = vmatprep.subr.mxu0 0.0
    %315 = vmatpush2.msra.mxu0 0.0
    %316 = vmatprep.subr.mxu0 0.0
    %317 = vmatpush2.msra.mxu0 0.0
    %318 = vmatprep.subr.mxu0 0.0
    %319 = vmatpush2.msra.mxu0 0.0
    %320 = vmatprep.subr.mxu0 0.0
    %321 = vmatpush2.msra.mxu0 0.0
    %322 = vmatprep.subr.mxu0 0.0
    %323 = vmatpush2.msra.mxu0 0.0
    %324 = vmatprep.subr.mxu0 0.0
    %325 = vmatpush2.msra.mxu0 0.0
    %326 = vmatprep.subr.mxu0 0.0
    %327 = vmatpush2.msra.mxu0 0.0
    %328 = vmatprep.subr.mxu0 0.0
    %329 = vmatpush2.msra.mxu0 0.0
    %330 = vmatprep.subr.mxu0 0.0
    %331 = vmatpush2.msra.mxu0 0.0
    %332 = vmatprep.subr.mxu0 0.0
    %333 = vmatpush2.msra.mxu0 0.0
    %334 = vmatprep.subr.mxu0 0.0
    %335 = vmatpush2.msra.mxu0 0.0
    %336 = vmatprep.mubr.f32.mxu0 0.0
    %337 = vmatmul.mubr.f32.gmra.mxu0 %v261
    %v338 = vpop.f32.mrf.mxu0
    %v339 = vadd.f32 %v258, %v338
    %v340 = vpop.f32.mrf.mxu0
    %341 = vmatprep.mubr.f32.mxu0 0.0
    %342 = vmatmul.mubr.f32.gmra.mxu0 %v264
    %v343 = vpop.f32.mrf.mxu0
    %v344 = vadd.f32 %v258, %v343
    %v345 = vpop.f32.mrf.mxu0
    %346 = vmatprep.mubr.f32.mxu0 0.0
    %347 = vmatmul.mubr.f32.gmra.mxu0 %v267
    %v348 = vpop.f32.mrf.mxu0
    %v349 = vadd.f32 %v258, %v348
    %v350 = vpop.f32.mrf.mxu0
    %351 = vmatprep.mubr.f32.mxu0 0.0
    %352 = vmatmul.mubr.f32.gmra.mxu0 %v270
    %v353 = vpop.f32.mrf.mxu0
    %v354 = vadd.f32 %v258, %v353
    %v355 = vpop.f32.mrf.mxu0
    %356 = vdwg.mxu0
    %v357 = vmax.f32 %v339, 0.0
    %v358 = vmax.f32 %v344, 0.0
    %v359 = vmax.f32 %v349, 0.0
    %v360 = vmax.f32 %v354, 0.0
    %vm361 = vcmask 261120
    %v362 = vsel %vm361, %v357, 0.0
    %v363 = vsel %vm361, %v358, 0.0
    %v364 = vadd.f32 %v362, %v363
    %v365 = vsel %vm361, %v359, 0.0
    %v366 = vadd.f32 %v364, %v365
    %v367 = vsel %vm361, %v360, 0.0
    %v368 = vadd.f32 %v366, %v367
    %v369 = vrot.slane %v368, 4
    %v370 = vadd.f32 %v368, %v369
    %v371 = vrot.slane %v370, 2
    %v372 = vadd.f32 %v370, %v371
    %v373 = vrot.slane %v372, 1
    %v374 = vadd.f32 %v372, %v373
    %v375 = vrcp.pop 32.0
    %v376 = vmul.f32 %v374, %v375
    %v377 = vsub.f32 %v357, %v376
    %v378 = vsub.f32 %v358, %v376
    %v379 = vsub.f32 %v359, %v376
    %v380 = vsub.f32 %v360, %v376
    %v381 = vmul.f32 %v377, %v377
    %v382 = vmul.f32 %v378, %v378
    %v383 = vmul.f32 %v379, %v379
    %v384 = vmul.f32 %v380, %v380
    %v385 = vsel %vm361, %v381, 0.0
    %v386 = vsel %vm361, %v382, 0.0
    %v387 = vadd.f32 %v385, %v386
    %v388 = vsel %vm361, %v383, 0.0
    %v389 = vadd.f32 %v387, %v388
    %v390 = vsel %vm361, %v384, 0.0
    %v391 = vadd.f32 %v389, %v390
    %v392 = vrot.slane %v391, 4
    %v393 = vadd.f32 %v391, %v392
    %v394 = vrot.slane %v393, 2
    %v395 = vadd.f32 %v393, %v394
    %v396 = vrot.slane %v395, 1
    %v397 = vadd.f32 %v395, %v396
    %v398 = vmul.f32 %v397, %v375
    %v399 = vadd.f32 %v398, 1e-05
    %v400 = vrsqrt.pop %v399
    %v401 = vmul.f32 %v377, %v400
    %v402 = vmul.f32 %v378, %v400
    %v403 = vmul.f32 %v379, %v400
    %v404 = vmul.f32 %v380, %v400
    %v406 = vlaneseq
    %v407 = vshrl.u32 %v406, 7
    %v408 = vsub.s32 0, %v407
    %v409 = vrot.slane %v68, %v408
    %v411 = vmul.f32 %v401, %v409
    %v412 = vmul.f32 %v402, %v409
    %v413 = vmul.f32 %v403, %v409
    %v414 = vmul.f32 %v404, %v409
    %v416 = vlaneseq
    %v417 = vshrl.u32 %v416, 7
    %v418 = vsub.s32 0, %v417
    %v419 = vrot.slane %v69, %v418
    %v421 = vadd.f32 %v411, %v419
    %v422 = vadd.f32 %v412, %v419
    %v423 = vadd.f32 %v413, %v419
    %v424 = vadd.f32 %v414, %v419
    %v425 = vld [vmem:[%s6] sm:$0xff]
    %v426 = vld [vmem:[%s6 + $0x8] sm:$0xff]
    %v427 = vld [vmem:[%s6 + $0x10] sm:$0xff]
    %v428 = vld [vmem:[%s6 + $0x18] sm:$0xff]
    %v429 = vld [vmem:[%s6 + $0x20] sm:$0xff]
    %v430 = vld [vmem:[%s6 + $0x28] sm:$0xff]
    %v431 = vld [vmem:[%s6 + $0x30] sm:$0xff]
    %v432 = vld [vmem:[%s6 + $0x38] sm:$0xff]
    %v433 = vld [vmem:[%s7] sm:$0x1]
    %v434 = vld [vmem:[%s8] sm:$0x1]
    %v435 = vld [vmem:[%s9] sm:$0x1]
    %436 = vmatprep.subr.mxu0 0.0
    %437 = vmatpush1.msra.mxu0 0.0
    %438 = vmatprep.subr.mxu0 0.0
    %439 = vmatpush1.msra.mxu0 0.0
    %440 = vmatprep.subr.mxu0 0.0
    %441 = vmatpush1.msra.mxu0 0.0
    %442 = vmatprep.subr.mxu0 0.0
    %443 = vmatpush1.msra.mxu0 0.0
    %444 = vmatprep.subr.mxu0 0.0
    %445 = vmatpush1.msra.mxu0 0.0
    %446 = vmatprep.subr.mxu0 0.0
    %447 = vmatpush1.msra.mxu0 0.0
    %448 = vmatprep.subr.mxu0 0.0
    %449 = vmatpush1.msra.mxu0 0.0
    %450 = vmatprep.subr.mxu0 0.0
    %451 = vmatpush1.msra.mxu0 0.0
    %452 = vmatprep.subr.mxu0 0.0
    %453 = vmatpush1.msra.mxu0 0.0
    %454 = vmatprep.subr.mxu0 0.0
    %455 = vmatpush1.msra.mxu0 0.0
    %456 = vmatprep.subr.mxu0 0.0
    %457 = vmatpush1.msra.mxu0 0.0
    %458 = vmatprep.subr.mxu0 0.0
    %459 = vmatpush1.msra.mxu0 0.0
    %460 = vmatprep.subr.mxu0 0.0
    %461 = vmatpush1.msra.mxu0 0.0
    %462 = vmatprep.subr.mxu0 0.0
    %463 = vmatpush1.msra.mxu0 0.0
    %464 = vmatprep.subr.mxu0 0.0
    %465 = vmatpush1.msra.mxu0 %v422
    %466 = vmatprep.subr.mxu0 0.0
    %467 = vmatpush1.msra.mxu0 %v421
    %468 = vmatprep.subr.mxu0 0.0
    %469 = vmatpush2.msra.mxu0 0.0
    %470 = vmatprep.subr.mxu0 0.0
    %471 = vmatpush2.msra.mxu0 0.0
    %472 = vmatprep.subr.mxu0 0.0
    %473 = vmatpush2.msra.mxu0 0.0
    %474 = vmatprep.subr.mxu0 0.0
    %475 = vmatpush2.msra.mxu0 0.0
    %476 = vmatprep.subr.mxu0 0.0
    %477 = vmatpush2.msra.mxu0 0.0
    %478 = vmatprep.subr.mxu0 0.0
    %479 = vmatpush2.msra.mxu0 0.0
    %480 = vmatprep.subr.mxu0 0.0
    %481 = vmatpush2.msra.mxu0 0.0
    %482 = vmatprep.subr.mxu0 0.0
    %483 = vmatpush2.msra.mxu0 0.0
    %484 = vmatprep.subr.mxu0 0.0
    %485 = vmatpush2.msra.mxu0 0.0
    %486 = vmatprep.subr.mxu0 0.0
    %487 = vmatpush2.msra.mxu0 0.0
    %488 = vmatprep.subr.mxu0 0.0
    %489 = vmatpush2.msra.mxu0 0.0
    %490 = vmatprep.subr.mxu0 0.0
    %491 = vmatpush2.msra.mxu0 0.0
    %492 = vmatprep.subr.mxu0 0.0
    %493 = vmatpush2.msra.mxu0 0.0
    %494 = vmatprep.subr.mxu0 0.0
    %495 = vmatpush2.msra.mxu0 0.0
    %496 = vmatprep.subr.mxu0 0.0
    %497 = vmatpush2.msra.mxu0 0.0
    %498 = vmatprep.subr.mxu0 0.0
    %499 = vmatpush2.msra.mxu0 0.0
    %500 = vmatprep.mubr.f32.mxu0 0.0
    %501 = vmatmul.mubr.f32.gmra.mxu0 %v72
    %v502 = vpop.f32.mrf.mxu0
    %v503 = vadd.f32 0.0, %v502
    %v504 = vpop.f32.mrf.mxu0
    %505 = vmatprep.mubr.f32.mxu0 0.0
    %506 = vmatmul.mubr.f32.gmra.mxu0 %v75
    %v507 = vpop.f32.mrf.mxu0
    %v508 = vadd.f32 0.0, %v507
    %v509 = vpop.f32.mrf.mxu0
    %510 = vdwg.mxu0
    %511 = vmatprep.subr.mxu0 0.0
    %512 = vmatpush1.msra.mxu0 0.0
    %513 = vmatprep.subr.mxu0 0.0
    %514 = vmatpush1.msra.mxu0 0.0
    %515 = vmatprep.subr.mxu0 0.0
    %516 = vmatpush1.msra.mxu0 0.0
    %517 = vmatprep.subr.mxu0 0.0
    %518 = vmatpush1.msra.mxu0 0.0
    %519 = vmatprep.subr.mxu0 0.0
    %520 = vmatpush1.msra.mxu0 0.0
    %521 = vmatprep.subr.mxu0 0.0
    %522 = vmatpush1.msra.mxu0 0.0
    %523 = vmatprep.subr.mxu0 0.0
    %524 = vmatpush1.msra.mxu0 0.0
    %525 = vmatprep.subr.mxu0 0.0
    %526 = vmatpush1.msra.mxu0 0.0
    %527 = vmatprep.subr.mxu0 0.0
    %528 = vmatpush1.msra.mxu0 0.0
    %529 = vmatprep.subr.mxu0 0.0
    %530 = vmatpush1.msra.mxu0 0.0
    %531 = vmatprep.subr.mxu0 0.0
    %532 = vmatpush1.msra.mxu0 0.0
    %533 = vmatprep.subr.mxu0 0.0
    %534 = vmatpush1.msra.mxu0 0.0
    %535 = vmatprep.subr.mxu0 0.0
    %536 = vmatpush1.msra.mxu0 0.0
    %537 = vmatprep.subr.mxu0 0.0
    %538 = vmatpush1.msra.mxu0 0.0
    %539 = vmatprep.subr.mxu0 0.0
    %540 = vmatpush1.msra.mxu0 %v424
    %541 = vmatprep.subr.mxu0 0.0
    %542 = vmatpush1.msra.mxu0 %v423
    %543 = vmatprep.subr.mxu0 0.0
    %544 = vmatpush2.msra.mxu0 0.0
    %545 = vmatprep.subr.mxu0 0.0
    %546 = vmatpush2.msra.mxu0 0.0
    %547 = vmatprep.subr.mxu0 0.0
    %548 = vmatpush2.msra.mxu0 0.0
    %549 = vmatprep.subr.mxu0 0.0
    %550 = vmatpush2.msra.mxu0 0.0
    %551 = vmatprep.subr.mxu0 0.0
    %552 = vmatpush2.msra.mxu0 0.0
    %553 = vmatprep.subr.mxu0 0.0
    %554 = vmatpush2.msra.mxu0 0.0
    %555 = vmatprep.subr.mxu0 0.0
    %556 = vmatpush2.msra.mxu0 0.0
    %557 = vmatprep.subr.mxu0 0.0
    %558 = vmatpush2.msra.mxu0 0.0
    %559 = vmatprep.subr.mxu0 0.0
    %560 = vmatpush2.msra.mxu0 0.0
    %561 = vmatprep.subr.mxu0 0.0
    %562 = vmatpush2.msra.mxu0 0.0
    %563 = vmatprep.subr.mxu0 0.0
    %564 = vmatpush2.msra.mxu0 0.0
    %565 = vmatprep.subr.mxu0 0.0
    %566 = vmatpush2.msra.mxu0 0.0
    %567 = vmatprep.subr.mxu0 0.0
    %568 = vmatpush2.msra.mxu0 0.0
    %569 = vmatprep.subr.mxu0 0.0
    %570 = vmatpush2.msra.mxu0 0.0
    %571 = vmatprep.subr.mxu0 0.0
    %572 = vmatpush2.msra.mxu0 0.0
    %573 = vmatprep.subr.mxu0 0.0
    %574 = vmatpush2.msra.mxu0 0.0
    %575 = vmatprep.mubr.f32.mxu0 0.0
    %576 = vmatmul.mubr.f32.gmra.mxu0 %v153
    %v577 = vpop.f32.mrf.mxu0
    %v578 = vadd.f32 0.0, %v577
    %v579 = vpop.f32.mrf.mxu0
    %580 = vmatprep.mubr.f32.mxu0 0.0
    %581 = vmatmul.mubr.f32.gmra.mxu0 %v156
    %v582 = vpop.f32.mrf.mxu0
    %v583 = vadd.f32 0.0, %v582
    %v584 = vpop.f32.mrf.mxu0
    %585 = vdwg.mxu0
    %590 = vrot.lane.b32.xlu0 %v421, 32
    %v591 = vpop.permute.xlu0 %590
    %592 = vrot.lane.b32.xlu0 %v422, 32
    %v593 = vpop.permute.xlu0 %592
    %594 = vrot.lane.b32.xlu0 %v423, 32
    %v595 = vpop.permute.xlu0 %594
    %596 = vrot.lane.b32.xlu0 %v424, 32
    %v597 = vpop.permute.xlu0 %596
    %v602 = vsel %vm361, %v503, %v591
    %v603 = vsel %vm361, %v508, %v593
    %v604 = vsel %vm361, %v578, %v595
    %v605 = vsel %vm361, %v583, %v597
    %v607 = vlaneseq
    %v608 = vshrl.u32 %v607, 7
    %v609 = vsub.s32 0, %v608
    %v610 = vrot.slane %v433, %v609
    %vm612 = vcmask 523264
    %v614 = vsel %vm612, %v602, 0
    %v617 = vsel %vm612, %v603, 0
    %v620 = vsel %vm612, %v604, 0
    %v623 = vsel %vm612, %v605, 0
    %625 = vmatprep.subr.mxu0 0.0
    %626 = vmatpush1.msra.mxu0 0.0
    %627 = vmatprep.subr.mxu0 0.0
    %628 = vmatpush1.msra.mxu0 0.0
    %629 = vmatprep.subr.mxu0 0.0
    %630 = vmatpush1.msra.mxu0 0.0
    %631 = vmatprep.subr.mxu0 0.0
    %632 = vmatpush1.msra.mxu0 0.0
    %633 = vmatprep.subr.mxu0 0.0
    %634 = vmatpush1.msra.mxu0 0.0
    %635 = vmatprep.subr.mxu0 0.0
    %636 = vmatpush1.msra.mxu0 0.0
    %637 = vmatprep.subr.mxu0 0.0
    %638 = vmatpush1.msra.mxu0 0.0
    %639 = vmatprep.subr.mxu0 0.0
    %640 = vmatpush1.msra.mxu0 0.0
    %641 = vmatprep.subr.mxu0 0.0
    %642 = vmatpush1.msra.mxu0 %v432
    %643 = vmatprep.subr.mxu0 0.0
    %644 = vmatpush1.msra.mxu0 %v431
    %645 = vmatprep.subr.mxu0 0.0
    %646 = vmatpush1.msra.mxu0 %v430
    %647 = vmatprep.subr.mxu0 0.0
    %648 = vmatpush1.msra.mxu0 %v429
    %649 = vmatprep.subr.mxu0 0.0
    %650 = vmatpush1.msra.mxu0 %v428
    %651 = vmatprep.subr.mxu0 0.0
    %652 = vmatpush1.msra.mxu0 %v427
    %653 = vmatprep.subr.mxu0 0.0
    %654 = vmatpush1.msra.mxu0 %v426
    %655 = vmatprep.subr.mxu0 0.0
    %656 = vmatpush1.msra.mxu0 %v425
    %657 = vmatprep.subr.mxu0 0.0
    %658 = vmatpush2.msra.mxu0 0.0
    %659 = vmatprep.subr.mxu0 0.0
    %660 = vmatpush2.msra.mxu0 0.0
    %661 = vmatprep.subr.mxu0 0.0
    %662 = vmatpush2.msra.mxu0 0.0
    %663 = vmatprep.subr.mxu0 0.0
    %664 = vmatpush2.msra.mxu0 0.0
    %665 = vmatprep.subr.mxu0 0.0
    %666 = vmatpush2.msra.mxu0 0.0
    %667 = vmatprep.subr.mxu0 0.0
    %668 = vmatpush2.msra.mxu0 0.0
    %669 = vmatprep.subr.mxu0 0.0
    %670 = vmatpush2.msra.mxu0 0.0
    %671 = vmatprep.subr.mxu0 0.0
    %672 = vmatpush2.msra.mxu0 0.0
    %673 = vmatprep.subr.mxu0 0.0
    %674 = vmatpush2.msra.mxu0 0.0
    %675 = vmatprep.subr.mxu0 0.0
    %676 = vmatpush2.msra.mxu0 0.0
    %677 = vmatprep.subr.mxu0 0.0
    %678 = vmatpush2.msra.mxu0 0.0
    %679 = vmatprep.subr.mxu0 0.0
    %680 = vmatpush2.msra.mxu0 0.0
    %681 = vmatprep.subr.mxu0 0.0
    %682 = vmatpush2.msra.mxu0 0.0
    %683 = vmatprep.subr.mxu0 0.0
    %684 = vmatpush2.msra.mxu0 0.0
    %685 = vmatprep.subr.mxu0 0.0
    %686 = vmatpush2.msra.mxu0 0.0
    %687 = vmatprep.subr.mxu0 0.0
    %688 = vmatpush2.msra.mxu0 0.0
    %689 = vmatprep.mubr.f32.mxu0 0.0
    %690 = vmatmul.mubr.f32.gmra.mxu0 %v614
    %v691 = vpop.f32.mrf.mxu0
    %v692 = vadd.f32 %v610, %v691
    %v693 = vpop.f32.mrf.mxu0
    %694 = vmatprep.mubr.f32.mxu0 0.0
    %695 = vmatmul.mubr.f32.gmra.mxu0 %v617
    %v696 = vpop.f32.mrf.mxu0
    %v697 = vadd.f32 %v610, %v696
    %v698 = vpop.f32.mrf.mxu0
    %699 = vmatprep.mubr.f32.mxu0 0.0
    %700 = vmatmul.mubr.f32.gmra.mxu0 %v620
    %v701 = vpop.f32.mrf.mxu0
    %v702 = vadd.f32 %v610, %v701
    %v703 = vpop.f32.mrf.mxu0
    %704 = vmatprep.mubr.f32.mxu0 0.0
    %705 = vmatmul.mubr.f32.gmra.mxu0 %v623
    %v706 = vpop.f32.mrf.mxu0
    %v707 = vadd.f32 %v610, %v706
    %v708 = vpop.f32.mrf.mxu0
    %709 = vdwg.mxu0
    %v710 = vmax.f32 %v692, 0.0
    %v711 = vmax.f32 %v697, 0.0
    %v712 = vmax.f32 %v702, 0.0
    %v713 = vmax.f32 %v707, 0.0
    %v714 = vsel %vm361, %v710, 0.0
    %v715 = vsel %vm361, %v711, 0.0
    %v716 = vadd.f32 %v714, %v715
    %v717 = vsel %vm361, %v712, 0.0
    %v718 = vadd.f32 %v716, %v717
    %v719 = vsel %vm361, %v713, 0.0
    %v720 = vadd.f32 %v718, %v719
    %v721 = vrot.slane %v720, 4
    %v722 = vadd.f32 %v720, %v721
    %v723 = vrot.slane %v722, 2
    %v724 = vadd.f32 %v722, %v723
    %v725 = vrot.slane %v724, 1
    %v726 = vadd.f32 %v724, %v725
    %v727 = vmul.f32 %v726, %v375
    %v728 = vsub.f32 %v710, %v727
    %v729 = vsub.f32 %v711, %v727
    %v730 = vsub.f32 %v712, %v727
    %v731 = vsub.f32 %v713, %v727
    %v732 = vmul.f32 %v728, %v728
    %v733 = vmul.f32 %v729, %v729
    %v734 = vmul.f32 %v730, %v730
    %v735 = vmul.f32 %v731, %v731
    %v736 = vsel %vm361, %v732, 0.0
    %v737 = vsel %vm361, %v733, 0.0
    %v738 = vadd.f32 %v736, %v737
    %v739 = vsel %vm361, %v734, 0.0
    %v740 = vadd.f32 %v738, %v739
    %v741 = vsel %vm361, %v735, 0.0
    %v742 = vadd.f32 %v740, %v741
    %v743 = vrot.slane %v742, 4
    %v744 = vadd.f32 %v742, %v743
    %v745 = vrot.slane %v744, 2
    %v746 = vadd.f32 %v744, %v745
    %v747 = vrot.slane %v746, 1
    %v748 = vadd.f32 %v746, %v747
    %v749 = vmul.f32 %v748, %v375
    %v750 = vadd.f32 %v749, 1e-05
    %v751 = vrsqrt.pop %v750
    %v752 = vmul.f32 %v728, %v751
    %v753 = vmul.f32 %v729, %v751
    %v754 = vmul.f32 %v730, %v751
    %v755 = vmul.f32 %v731, %v751
    %v757 = vlaneseq
    %v758 = vshrl.u32 %v757, 7
    %v759 = vsub.s32 0, %v758
    %v760 = vrot.slane %v434, %v759
    %v762 = vmul.f32 %v752, %v760
    %v763 = vmul.f32 %v753, %v760
    %v764 = vmul.f32 %v754, %v760
    %v765 = vmul.f32 %v755, %v760
    %v767 = vlaneseq
    %v768 = vshrl.u32 %v767, 7
    %v769 = vsub.s32 0, %v768
    %v770 = vrot.slane %v435, %v769
    %v772 = vadd.f32 %v762, %v770
    %v773 = vadd.f32 %v763, %v770
    %v774 = vadd.f32 %v764, %v770
    %v775 = vadd.f32 %v765, %v770
    %v776 = vld [vmem:[%s10] sm:$0xff]
    %v777 = vld [vmem:[%s10 + $0x8] sm:$0xff]
    %v778 = vld [vmem:[%s10 + $0x10] sm:$0xff]
    %v779 = vld [vmem:[%s10 + $0x18] sm:$0xff]
    %v780 = vld [vmem:[%s10 + $0x20] sm:$0xff]
    %v781 = vld [vmem:[%s10 + $0x28] sm:$0xff]
    %v782 = vld [vmem:[%s10 + $0x30] sm:$0xff]
    %v783 = vld [vmem:[%s10 + $0x38] sm:$0xff]
    %v784 = vld [vmem:[%s11] sm:$0x1]
    %v785 = vld [vmem:[%s12] sm:$0x1]
    %v786 = vld [vmem:[%s13] sm:$0x1]
    %787 = vmatprep.subr.mxu0 0.0
    %788 = vmatpush1.msra.mxu0 0.0
    %789 = vmatprep.subr.mxu0 0.0
    %790 = vmatpush1.msra.mxu0 0.0
    %791 = vmatprep.subr.mxu0 0.0
    %792 = vmatpush1.msra.mxu0 0.0
    %793 = vmatprep.subr.mxu0 0.0
    %794 = vmatpush1.msra.mxu0 0.0
    %795 = vmatprep.subr.mxu0 0.0
    %796 = vmatpush1.msra.mxu0 0.0
    %797 = vmatprep.subr.mxu0 0.0
    %798 = vmatpush1.msra.mxu0 0.0
    %799 = vmatprep.subr.mxu0 0.0
    %800 = vmatpush1.msra.mxu0 0.0
    %801 = vmatprep.subr.mxu0 0.0
    %802 = vmatpush1.msra.mxu0 0.0
    %803 = vmatprep.subr.mxu0 0.0
    %804 = vmatpush1.msra.mxu0 0.0
    %805 = vmatprep.subr.mxu0 0.0
    %806 = vmatpush1.msra.mxu0 0.0
    %807 = vmatprep.subr.mxu0 0.0
    %808 = vmatpush1.msra.mxu0 0.0
    %809 = vmatprep.subr.mxu0 0.0
    %810 = vmatpush1.msra.mxu0 0.0
    %811 = vmatprep.subr.mxu0 0.0
    %812 = vmatpush1.msra.mxu0 0.0
    %813 = vmatprep.subr.mxu0 0.0
    %814 = vmatpush1.msra.mxu0 0.0
    %815 = vmatprep.subr.mxu0 0.0
    %816 = vmatpush1.msra.mxu0 %v773
    %817 = vmatprep.subr.mxu0 0.0
    %818 = vmatpush1.msra.mxu0 %v772
    %819 = vmatprep.subr.mxu0 0.0
    %820 = vmatpush2.msra.mxu0 0.0
    %821 = vmatprep.subr.mxu0 0.0
    %822 = vmatpush2.msra.mxu0 0.0
    %823 = vmatprep.subr.mxu0 0.0
    %824 = vmatpush2.msra.mxu0 0.0
    %825 = vmatprep.subr.mxu0 0.0
    %826 = vmatpush2.msra.mxu0 0.0
    %827 = vmatprep.subr.mxu0 0.0
    %828 = vmatpush2.msra.mxu0 0.0
    %829 = vmatprep.subr.mxu0 0.0
    %830 = vmatpush2.msra.mxu0 0.0
    %831 = vmatprep.subr.mxu0 0.0
    %832 = vmatpush2.msra.mxu0 0.0
    %833 = vmatprep.subr.mxu0 0.0
    %834 = vmatpush2.msra.mxu0 0.0
    %835 = vmatprep.subr.mxu0 0.0
    %836 = vmatpush2.msra.mxu0 0.0
    %837 = vmatprep.subr.mxu0 0.0
    %838 = vmatpush2.msra.mxu0 0.0
    %839 = vmatprep.subr.mxu0 0.0
    %840 = vmatpush2.msra.mxu0 0.0
    %841 = vmatprep.subr.mxu0 0.0
    %842 = vmatpush2.msra.mxu0 0.0
    %843 = vmatprep.subr.mxu0 0.0
    %844 = vmatpush2.msra.mxu0 0.0
    %845 = vmatprep.subr.mxu0 0.0
    %846 = vmatpush2.msra.mxu0 0.0
    %847 = vmatprep.subr.mxu0 0.0
    %848 = vmatpush2.msra.mxu0 0.0
    %849 = vmatprep.subr.mxu0 0.0
    %850 = vmatpush2.msra.mxu0 0.0
    %851 = vmatprep.mubr.f32.mxu0 0.0
    %852 = vmatmul.mubr.f32.gmra.mxu0 %v72
    %v853 = vpop.f32.mrf.mxu0
    %v854 = vadd.f32 0.0, %v853
    %v855 = vpop.f32.mrf.mxu0
    %856 = vmatprep.mubr.f32.mxu0 0.0
    %857 = vmatmul.mubr.f32.gmra.mxu0 %v75
    %v858 = vpop.f32.mrf.mxu0
    %v859 = vadd.f32 0.0, %v858
    %v860 = vpop.f32.mrf.mxu0
    %861 = vdwg.mxu0
    %862 = vmatprep.subr.mxu0 0.0
    %863 = vmatpush1.msra.mxu0 0.0
    %864 = vmatprep.subr.mxu0 0.0
    %865 = vmatpush1.msra.mxu0 0.0
    %866 = vmatprep.subr.mxu0 0.0
    %867 = vmatpush1.msra.mxu0 0.0
    %868 = vmatprep.subr.mxu0 0.0
    %869 = vmatpush1.msra.mxu0 0.0
    %870 = vmatprep.subr.mxu0 0.0
    %871 = vmatpush1.msra.mxu0 0.0
    %872 = vmatprep.subr.mxu0 0.0
    %873 = vmatpush1.msra.mxu0 0.0
    %874 = vmatprep.subr.mxu0 0.0
    %875 = vmatpush1.msra.mxu0 0.0
    %876 = vmatprep.subr.mxu0 0.0
    %877 = vmatpush1.msra.mxu0 0.0
    %878 = vmatprep.subr.mxu0 0.0
    %879 = vmatpush1.msra.mxu0 0.0
    %880 = vmatprep.subr.mxu0 0.0
    %881 = vmatpush1.msra.mxu0 0.0
    %882 = vmatprep.subr.mxu0 0.0
    %883 = vmatpush1.msra.mxu0 0.0
    %884 = vmatprep.subr.mxu0 0.0
    %885 = vmatpush1.msra.mxu0 0.0
    %886 = vmatprep.subr.mxu0 0.0
    %887 = vmatpush1.msra.mxu0 0.0
    %888 = vmatprep.subr.mxu0 0.0
    %889 = vmatpush1.msra.mxu0 0.0
    %890 = vmatprep.subr.mxu0 0.0
    %891 = vmatpush1.msra.mxu0 %v775
    %892 = vmatprep.subr.mxu0 0.0
    %893 = vmatpush1.msra.mxu0 %v774
    %894 = vmatprep.subr.mxu0 0.0
    %895 = vmatpush2.msra.mxu0 0.0
    %896 = vmatprep.subr.mxu0 0.0
    %897 = vmatpush2.msra.mxu0 0.0
    %898 = vmatprep.subr.mxu0 0.0
    %899 = vmatpush2.msra.mxu0 0.0
    %900 = vmatprep.subr.mxu0 0.0
    %901 = vmatpush2.msra.mxu0 0.0
    %902 = vmatprep.subr.mxu0 0.0
    %903 = vmatpush2.msra.mxu0 0.0
    %904 = vmatprep.subr.mxu0 0.0
    %905 = vmatpush2.msra.mxu0 0.0
    %906 = vmatprep.subr.mxu0 0.0
    %907 = vmatpush2.msra.mxu0 0.0
    %908 = vmatprep.subr.mxu0 0.0
    %909 = vmatpush2.msra.mxu0 0.0
    %910 = vmatprep.subr.mxu0 0.0
    %911 = vmatpush2.msra.mxu0 0.0
    %912 = vmatprep.subr.mxu0 0.0
    %913 = vmatpush2.msra.mxu0 0.0
    %914 = vmatprep.subr.mxu0 0.0
    %915 = vmatpush2.msra.mxu0 0.0
    %916 = vmatprep.subr.mxu0 0.0
    %917 = vmatpush2.msra.mxu0 0.0
    %918 = vmatprep.subr.mxu0 0.0
    %919 = vmatpush2.msra.mxu0 0.0
    %920 = vmatprep.subr.mxu0 0.0
    %921 = vmatpush2.msra.mxu0 0.0
    %922 = vmatprep.subr.mxu0 0.0
    %923 = vmatpush2.msra.mxu0 0.0
    %924 = vmatprep.subr.mxu0 0.0
    %925 = vmatpush2.msra.mxu0 0.0
    %926 = vmatprep.mubr.f32.mxu0 0.0
    %927 = vmatmul.mubr.f32.gmra.mxu0 %v153
    %v928 = vpop.f32.mrf.mxu0
    %v929 = vadd.f32 0.0, %v928
    %v930 = vpop.f32.mrf.mxu0
    %931 = vmatprep.mubr.f32.mxu0 0.0
    %932 = vmatmul.mubr.f32.gmra.mxu0 %v156
    %v933 = vpop.f32.mrf.mxu0
    %v934 = vadd.f32 0.0, %v933
    %v935 = vpop.f32.mrf.mxu0
    %936 = vdwg.mxu0
    %941 = vrot.lane.b32.xlu0 %v772, 32
    %v942 = vpop.permute.xlu0 %941
    %943 = vrot.lane.b32.xlu0 %v773, 32
    %v944 = vpop.permute.xlu0 %943
    %945 = vrot.lane.b32.xlu0 %v774, 32
    %v946 = vpop.permute.xlu0 %945
    %947 = vrot.lane.b32.xlu0 %v775, 32
    %v948 = vpop.permute.xlu0 %947
    %v953 = vsel %vm361, %v854, %v942
    %v954 = vsel %vm361, %v859, %v944
    %v955 = vsel %vm361, %v929, %v946
    %v956 = vsel %vm361, %v934, %v948
    %v958 = vlaneseq
    %v959 = vshrl.u32 %v958, 7
    %v960 = vsub.s32 0, %v959
    %v961 = vrot.slane %v784, %v960
    %v964 = vsel %vm612, %v953, 0
    %v967 = vsel %vm612, %v954, 0
    %v970 = vsel %vm612, %v955, 0
    %v973 = vsel %vm612, %v956, 0
    %975 = vmatprep.subr.mxu0 0.0
    %976 = vmatpush1.msra.mxu0 0.0
    %977 = vmatprep.subr.mxu0 0.0
    %978 = vmatpush1.msra.mxu0 0.0
    %979 = vmatprep.subr.mxu0 0.0
    %980 = vmatpush1.msra.mxu0 0.0
    %981 = vmatprep.subr.mxu0 0.0
    %982 = vmatpush1.msra.mxu0 0.0
    %983 = vmatprep.subr.mxu0 0.0
    %984 = vmatpush1.msra.mxu0 0.0
    %985 = vmatprep.subr.mxu0 0.0
    %986 = vmatpush1.msra.mxu0 0.0
    %987 = vmatprep.subr.mxu0 0.0
    %988 = vmatpush1.msra.mxu0 0.0
    %989 = vmatprep.subr.mxu0 0.0
    %990 = vmatpush1.msra.mxu0 0.0
    %991 = vmatprep.subr.mxu0 0.0
    %992 = vmatpush1.msra.mxu0 %v783
    %993 = vmatprep.subr.mxu0 0.0
    %994 = vmatpush1.msra.mxu0 %v782
    %995 = vmatprep.subr.mxu0 0.0
    %996 = vmatpush1.msra.mxu0 %v781
    %997 = vmatprep.subr.mxu0 0.0
    %998 = vmatpush1.msra.mxu0 %v780
    %999 = vmatprep.subr.mxu0 0.0
    %1000 = vmatpush1.msra.mxu0 %v779
    %1001 = vmatprep.subr.mxu0 0.0
    %1002 = vmatpush1.msra.mxu0 %v778
    %1003 = vmatprep.subr.mxu0 0.0
    %1004 = vmatpush1.msra.mxu0 %v777
    %1005 = vmatprep.subr.mxu0 0.0
    %1006 = vmatpush1.msra.mxu0 %v776
    %1007 = vmatprep.subr.mxu0 0.0
    %1008 = vmatpush2.msra.mxu0 0.0
    %1009 = vmatprep.subr.mxu0 0.0
    %1010 = vmatpush2.msra.mxu0 0.0
    %1011 = vmatprep.subr.mxu0 0.0
    %1012 = vmatpush2.msra.mxu0 0.0
    %1013 = vmatprep.subr.mxu0 0.0
    %1014 = vmatpush2.msra.mxu0 0.0
    %1015 = vmatprep.subr.mxu0 0.0
    %1016 = vmatpush2.msra.mxu0 0.0
    %1017 = vmatprep.subr.mxu0 0.0
    %1018 = vmatpush2.msra.mxu0 0.0
    %1019 = vmatprep.subr.mxu0 0.0
    %1020 = vmatpush2.msra.mxu0 0.0
    %1021 = vmatprep.subr.mxu0 0.0
    %1022 = vmatpush2.msra.mxu0 0.0
    %1023 = vmatprep.subr.mxu0 0.0
    %1024 = vmatpush2.msra.mxu0 0.0
    %1025 = vmatprep.subr.mxu0 0.0
    %1026 = vmatpush2.msra.mxu0 0.0
    %1027 = vmatprep.subr.mxu0 0.0
    %1028 = vmatpush2.msra.mxu0 0.0
    %1029 = vmatprep.subr.mxu0 0.0
    %1030 = vmatpush2.msra.mxu0 0.0
    %1031 = vmatprep.subr.mxu0 0.0
    %1032 = vmatpush2.msra.mxu0 0.0
    %1033 = vmatprep.subr.mxu0 0.0
    %1034 = vmatpush2.msra.mxu0 0.0
    %1035 = vmatprep.subr.mxu0 0.0
    %1036 = vmatpush2.msra.mxu0 0.0
    %1037 = vmatprep.subr.mxu0 0.0
    %1038 = vmatpush2.msra.mxu0 0.0
    %1039 = vmatprep.mubr.f32.mxu0 0.0
    %1040 = vmatmul.mubr.f32.gmra.mxu0 %v964
    %v1041 = vpop.f32.mrf.mxu0
    %v1042 = vadd.f32 %v961, %v1041
    %v1043 = vpop.f32.mrf.mxu0
    %1044 = vmatprep.mubr.f32.mxu0 0.0
    %1045 = vmatmul.mubr.f32.gmra.mxu0 %v967
    %v1046 = vpop.f32.mrf.mxu0
    %v1047 = vadd.f32 %v961, %v1046
    %v1048 = vpop.f32.mrf.mxu0
    %1049 = vmatprep.mubr.f32.mxu0 0.0
    %1050 = vmatmul.mubr.f32.gmra.mxu0 %v970
    %v1051 = vpop.f32.mrf.mxu0
    %v1052 = vadd.f32 %v961, %v1051
    %v1053 = vpop.f32.mrf.mxu0
    %1054 = vmatprep.mubr.f32.mxu0 0.0
    %1055 = vmatmul.mubr.f32.gmra.mxu0 %v973
    %v1056 = vpop.f32.mrf.mxu0
    %v1057 = vadd.f32 %v961, %v1056
    %v1058 = vpop.f32.mrf.mxu0
    %1059 = vdwg.mxu0
    %v1060 = vmax.f32 %v1042, 0.0
    %v1061 = vmax.f32 %v1047, 0.0
    %v1062 = vmax.f32 %v1052, 0.0
    %v1063 = vmax.f32 %v1057, 0.0
    %v1064 = vsel %vm70, %v1060, 0.0
    %v1065 = vsel %vm70, %v1061, 0.0
    %v1066 = vadd.f32 %v1064, %v1065
    %v1067 = vsel %vm70, %v1062, 0.0
    %v1068 = vadd.f32 %v1066, %v1067
    %v1069 = vsel %vm70, %v1063, 0.0
    %v1070 = vadd.f32 %v1068, %v1069
    %v1071 = vrot.slane %v1070, 4
    %v1072 = vadd.f32 %v1070, %v1071
    %v1073 = vrot.slane %v1072, 2
    %v1074 = vadd.f32 %v1072, %v1073
    %v1075 = vrot.slane %v1074, 1
    %v1076 = vadd.f32 %v1074, %v1075
    %v1077 = vmul.f32 %v1076, %v375
    %v1078 = vsub.f32 %v1060, %v1077
    %v1079 = vsub.f32 %v1061, %v1077
    %v1080 = vsub.f32 %v1062, %v1077
    %v1081 = vsub.f32 %v1063, %v1077
    %v1082 = vmul.f32 %v1078, %v1078
    %v1083 = vmul.f32 %v1079, %v1079
    %v1084 = vmul.f32 %v1080, %v1080
    %v1085 = vmul.f32 %v1081, %v1081
    %v1086 = vsel %vm70, %v1082, 0.0
    %v1087 = vsel %vm70, %v1083, 0.0
    %v1088 = vadd.f32 %v1086, %v1087
    %v1089 = vsel %vm70, %v1084, 0.0
    %v1090 = vadd.f32 %v1088, %v1089
    %v1091 = vsel %vm70, %v1085, 0.0
    %v1092 = vadd.f32 %v1090, %v1091
    %v1093 = vrot.slane %v1092, 4
    %v1094 = vadd.f32 %v1092, %v1093
    %v1095 = vrot.slane %v1094, 2
    %v1096 = vadd.f32 %v1094, %v1095
    %v1097 = vrot.slane %v1096, 1
    %v1098 = vadd.f32 %v1096, %v1097
    %v1099 = vmul.f32 %v1098, %v375
    %v1100 = vadd.f32 %v1099, 1e-05
    %v1101 = vrsqrt.pop %v1100
    %v1102 = vmul.f32 %v1078, %v1101
    %v1103 = vmul.f32 %v1079, %v1101
    %v1104 = vmul.f32 %v1080, %v1101
    %v1105 = vmul.f32 %v1081, %v1101
    %v1107 = vlaneseq
    %v1108 = vshrl.u32 %v1107, 7
    %v1109 = vsub.s32 0, %v1108
    %v1110 = vrot.slane %v785, %v1109
    %v1112 = vmul.f32 %v1102, %v1110
    %v1113 = vmul.f32 %v1103, %v1110
    %v1114 = vmul.f32 %v1104, %v1110
    %v1115 = vmul.f32 %v1105, %v1110
    %v1117 = vlaneseq
    %v1118 = vshrl.u32 %v1117, 7
    %v1119 = vsub.s32 0, %v1118
    %v1120 = vrot.slane %v786, %v1119
    %v1122 = vadd.f32 %v1112, %v1120
    %v1123 = vadd.f32 %v1113, %v1120
    %v1124 = vadd.f32 %v1114, %v1120
    %v1125 = vadd.f32 %v1115, %v1120
    %1130 = vrot.lane.b32.xlu0 %v1122, 64
    %v1131 = vpop.permute.xlu0 %1130
    %1132 = vrot.lane.b32.xlu0 %v1123, 64
    %v1133 = vpop.permute.xlu0 %1132
    %1134 = vrot.lane.b32.xlu0 %v1124, 64
    %v1135 = vpop.permute.xlu0 %1134
    %1136 = vrot.lane.b32.xlu0 %v1125, 64
    %v1137 = vpop.permute.xlu0 %1136
    %v1142 = vsel %vm361, %v421, %v942
    %v1143 = vsel %vm361, %v422, %v944
    %v1144 = vsel %vm361, %v423, %v946
    %v1145 = vsel %vm361, %v424, %v948
    %v1146 = vsel %vm612, %v1142, %v1131
    %v1147 = vsel %vm612, %v1143, %v1133
    %v1148 = vsel %vm612, %v1144, %v1135
    %v1149 = vsel %vm612, %v1145, %v1137
    %vm1150 = vcmask 654336
    %v1151 = vsel %vm1150, %v1146, 0.0
    %v1152 = vsel %vm1150, %v1147, 0.0
    %v1153 = vsel %vm1150, %v1148, 0.0
    %v1154 = vsel %vm1150, %v1149, 0.0
    %1155 = vst [vmem:[#allocation2] sm:$0xff] %v1151
    %1156 = vst [vmem:[#allocation2 + $0x8] sm:$0xff] %v1152
    %1157 = vst [vmem:[#allocation2 + $0x10] sm:$0xff] %v1153
    %1158 = vst [vmem:[#allocation2 + $0x18] sm:$0xff] %v1154
    %v1159 = vld [vmem:[%s14] sm:$0xff]
    %v1160 = vld [vmem:[%s14 + $0x8] sm:$0xff]
    %v1161 = vld [vmem:[%s14 + $0x10] sm:$0xff]
    %v1162 = vld [vmem:[%s14 + $0x18] sm:$0xff]
    %v1163 = vld [vmem:[%s14 + $0x20] sm:$0xff]
    %v1164 = vld [vmem:[%s14 + $0x28] sm:$0xff]
    %v1165 = vld [vmem:[%s14 + $0x30] sm:$0xff]
    %v1166 = vld [vmem:[%s14 + $0x38] sm:$0xff]
    %v1167 = vld [vmem:[%s14 + $0x40] sm:$0xff]
    %v1168 = vld [vmem:[%s14 + $0x48] sm:$0xff]
    %v1169 = vld [vmem:[%s14 + $0x50] sm:$0xff]
    %v1170 = vld [vmem:[%s14 + $0x58] sm:$0xff]
    %v1171 = vld [vmem:[%s14 + $0x60] sm:$0xff]
    %v1172 = vld [vmem:[%s14 + $0x68] sm:$0xff]
    %v1173 = vld [vmem:[%s14 + $0x70] sm:$0xff]
    %v1174 = vld [vmem:[%s14 + $0x78] sm:$0xff]
    %v1175 = vld [vmem:[%s15] sm:$0x1]
    %v1177 = vlaneseq
    %v1178 = vshrl.u32 %v1177, 7
    %v1179 = vsub.s32 0, %v1178
    %v1180 = vrot.slane %v1175, %v1179
    %1182 = vmatprep.subr.mxu0 0.0
    %1183 = vmatpush1.msra.mxu0 %v1174
    %1184 = vmatprep.subr.mxu0 0.0
    %1185 = vmatpush1.msra.mxu0 %v1173
    %1186 = vmatprep.subr.mxu0 0.0
    %1187 = vmatpush1.msra.mxu0 %v1172
    %1188 = vmatprep.subr.mxu0 0.0
    %1189 = vmatpush1.msra.mxu0 %v1171
    %1190 = vmatprep.subr.mxu0 0.0
    %1191 = vmatpush1.msra.mxu0 %v1170
    %1192 = vmatprep.subr.mxu0 0.0
    %1193 = vmatpush1.msra.mxu0 %v1169
    %1194 = vmatprep.subr.mxu0 0.0
    %1195 = vmatpush1.msra.mxu0 %v1168
    %1196 = vmatprep.subr.mxu0 0.0
    %1197 = vmatpush1.msra.mxu0 %v1167
    %1198 = vmatprep.subr.mxu0 0.0
    %1199 = vmatpush1.msra.mxu0 %v1166
    %1200 = vmatprep.subr.mxu0 0.0
    %1201 = vmatpush1.msra.mxu0 %v1165
    %1202 = vmatprep.subr.mxu0 0.0
    %1203 = vmatpush1.msra.mxu0 %v1164
    %1204 = vmatprep.subr.mxu0 0.0
    %1205 = vmatpush1.msra.mxu0 %v1163
    %1206 = vmatprep.subr.mxu0 0.0
    %1207 = vmatpush1.msra.mxu0 %v1162
    %1208 = vmatprep.subr.mxu0 0.0
    %1209 = vmatpush1.msra.mxu0 %v1161
    %1210 = vmatprep.subr.mxu0 0.0
    %1211 = vmatpush1.msra.mxu0 %v1160
    %1212 = vmatprep.subr.mxu0 0.0
    %1213 = vmatpush1.msra.mxu0 %v1159
    %1214 = vmatprep.subr.mxu0 0.0
    %1215 = vmatpush2.msra.mxu0 0.0
    %1216 = vmatprep.subr.mxu0 0.0
    %1217 = vmatpush2.msra.mxu0 0.0
    %1218 = vmatprep.subr.mxu0 0.0
    %1219 = vmatpush2.msra.mxu0 0.0
    %1220 = vmatprep.subr.mxu0 0.0
    %1221 = vmatpush2.msra.mxu0 0.0
    %1222 = vmatprep.subr.mxu0 0.0
    %1223 = vmatpush2.msra.mxu0 0.0
    %1224 = vmatprep.subr.mxu0 0.0
    %1225 = vmatpush2.msra.mxu0 0.0
    %1226 = vmatprep.subr.mxu0 0.0
    %1227 = vmatpush2.msra.mxu0 0.0
    %1228 = vmatprep.subr.mxu0 0.0
    %1229 = vmatpush2.msra.mxu0 0.0
    %1230 = vmatprep.subr.mxu0 0.0
    %1231 = vmatpush2.msra.mxu0 0.0
    %1232 = vmatprep.subr.mxu0 0.0
    %1233 = vmatpush2.msra.mxu0 0.0
    %1234 = vmatprep.subr.mxu0 0.0
    %1235 = vmatpush2.msra.mxu0 0.0
    %1236 = vmatprep.subr.mxu0 0.0
    %1237 = vmatpush2.msra.mxu0 0.0
    %1238 = vmatprep.subr.mxu0 0.0
    %1239 = vmatpush2.msra.mxu0 0.0
    %1240 = vmatprep.subr.mxu0 0.0
    %1241 = vmatpush2.msra.mxu0 0.0
    %1242 = vmatprep.subr.mxu0 0.0
    %1243 = vmatpush2.msra.mxu0 0.0
    %1244 = vmatprep.subr.mxu0 0.0
    %1245 = vmatpush2.msra.mxu0 0.0
    %1246 = vmatprep.mubr.f32.mxu0 0.0
    %1247 = vmatmul.mubr.f32.gmra.mxu0 %v1151
    %v1248 = vpop.f32.mrf.mxu0
    %v1249 = vadd.f32 %v1180, %v1248
    %v1250 = vpop.f32.mrf.mxu0
    %1251 = vmatprep.mubr.f32.mxu0 0.0
    %1252 = vmatmul.mubr.f32.gmra.mxu0 %v1152
    %v1253 = vpop.f32.mrf.mxu0
    %v1254 = vadd.f32 %v1180, %v1253
    %v1255 = vpop.f32.mrf.mxu0
    %1256 = vmatprep.mubr.f32.mxu0 0.0
    %1257 = vmatmul.mubr.f32.gmra.mxu0 %v1153
    %v1258 = vpop.f32.mrf.mxu0
    %v1259 = vadd.f32 %v1180, %v1258
    %v1260 = vpop.f32.mrf.mxu0
    %1261 = vmatprep.mubr.f32.mxu0 0.0
    %1262 = vmatmul.mubr.f32.gmra.mxu0 %v1154
    %v1263 = vpop.f32.mrf.mxu0
    %v1264 = vadd.f32 %v1180, %v1263
    %v1265 = vpop.f32.mrf.mxu0
    %1266 = vdwg.mxu0
    %v1267 = vmax.f32 %v1249, 0.0
    %v1268 = vmax.f32 %v1254, 0.0
    %v1269 = vmax.f32 %v1259, 0.0
    %v1270 = vmax.f32 %v1264, 0.0
    %1271 = vst [vmem:[#allocation4] sm:$0xff] %v1267
    %1272 = vst [vmem:[#allocation4 + $0x8] sm:$0xff] %v1268
    %1273 = vst [vmem:[#allocation4 + $0x10] sm:$0xff] %v1269
    %1274 = vst [vmem:[#allocation4 + $0x18] sm:$0xff] %v1270
    // Predicated region
    $region66: #{tpu_custom_call.1} parent=1 // pred_check
      _
    $region67: #{tpu_custom_call.1} parent=1 // pred_check_branch
      %1276 = sbr.rel (0) target = $region69
    $region68: #{tpu_custom_call.1} parent=1 // pred_region
      %s1278 = ssub.s32 512, 512
      %1279 = vsyncadd [#allocation3], %s1278
      %s1280 = sshll.u32 [#allocation2], 4
      %s1281 = int_to_ptr.vmem [resolvable:$true] %s1280
      %1286 = dma.vmem_to_hbm [thread:$0]  %s1281, 512, %s16, [#allocation3], 128, 128, 8
    $region69: #{tpu_custom_call.1} parent=1 // pred_fallthru
      _
    // Predicated region
    $region70: #{tpu_custom_call.1} parent=1 // pred_check
      _
    $region71: #{tpu_custom_call.1} parent=1 // pred_check_branch
      %1288 = sbr.rel (0) target = $region73
    $region72: #{tpu_custom_call.1} parent=1 // pred_region
      %s1290 = ssub.s32 512, 512
      %1291 = vsyncadd [#allocation5], %s1290
      %s1292 = sshll.u32 [#allocation4], 4
      %s1293 = int_to_ptr.vmem [resolvable:$true] %s1292
      %1298 = dma.vmem_to_hbm [thread:$0]  %s1293, 512, %s17, [#allocation5], 128, 128, 8
    $region73: #{tpu_custom_call.1} parent=1 // pred_fallthru
      _
    // Predicated region
    $region74: #{tpu_custom_call.1} parent=1 // pred_check
      _
    $region75: #{tpu_custom_call.1} parent=1 // pred_check_branch
      %1300 = sbr.rel (0) target = $region77
    $region76: #{tpu_custom_call.1} parent=1 // pred_region
      %1301 = dma.done [#allocation3], 512
    $region77: #{tpu_custom_call.1} parent=1 // pred_fallthru
      _
    // Predicated region
    $region78: #{tpu_custom_call.1} parent=1 // pred_check
      _
    $region79: #{tpu_custom_call.1} parent=1 // pred_check_branch
      %1303 = sbr.rel (0) target = $region81
    $region80: #{tpu_custom_call.1} parent=1 // pred_region
      %1304 = dma.done [#allocation5], 512
    $region81: #{tpu_custom_call.1} parent=1 // pred_fallthru
      _
    %1305 = vsyncpa [#allocation3], 1
    %1306 = vsyncpa [#allocation5], 1

</llo_original>
